<compile_context>
chip_gen: v7x
topology: tpu7x:2x2x1
jax: 0.10.0
libtpu: 0.0.40
codegen_flags: <defaults>
</compile_context>

<pallas_src>
import functools

import jax
import jax.numpy as jnp
from jax.experimental import pallas as pl
from jax.experimental.pallas import tpu as pltpu

LN_EPS = 1e-5  # torch.nn.LayerNorm default eps
LANE = 128
SUBLANE = 8
TK_TARGET = 2048  # K-tile width for the input projection


def _round_up(x: int, m: int) -> int:
    return ((x + m - 1) // m) * m


def _vmem_capacity_bytes() -> int:
    """Physical VMEM per TensorCore; conservative fallback (v7x) if unknown."""
    try:
        return int(pltpu.get_tpu_info().vmem_capacity_bytes)
    except Exception:
        return 64 * 1024 * 1024


def _make_kernel(num_blocks: int, hidden_dim: int):
    """Fused MLP kernel: K-tiled input projection + residual blocks + output."""
    inv_h = 1.0 / float(hidden_dim)

    def kernel(*refs):
        # refs layout:
        #   [x, w0, b0, (w, b, gamma, beta) * num_blocks, wo, bo, out, acc]
        x_ref, w0_ref, b0_ref = refs[0], refs[1], refs[2]
        idx = 3
        block_param_refs = []
        for _ in range(num_blocks):
            block_param_refs.append(refs[idx:idx + 4])
            idx += 4
        wo_ref, bo_ref = refs[idx], refs[idx + 1]
        out_ref = refs[idx + 2]
        acc_ref = refs[idx + 3]

        k = pl.program_id(1)
        nk = pl.num_programs(1)

        # ---- Input projection, accumulated over the K grid axis ----
        @pl.when(k == 0)
        def _():
            acc_ref[...] = jnp.zeros_like(acc_ref)

        # bf16 x bf16 -> f32 accumulation on the MXU.
        acc_ref[...] += jnp.dot(x_ref[...], w0_ref[...],
                                preferred_element_type=jnp.float32)

        # ---- Epilogue: residual blocks + lane-dense output (last K step) ----
        @pl.when(k == nk - 1)
        def _():
            h = acc_ref[...] + b0_ref[...]  # f32 (TB, hidden)

            # Residual block: h + ReLU(LayerNorm(h @ W + b)); skip == Identity
            # because in_channels == out_channels == hidden_dim.
            for w_ref, b_ref, g_ref, be_ref in block_param_refs:
                y = jnp.dot(h.astype(jnp.bfloat16), w_ref[...],
                            preferred_element_type=jnp.float32) + b_ref[...]
                # One-pass LayerNorm statistics (both cross-lane reductions are
                # independent); all elementwise math stays in f32.
                s1 = jnp.sum(y, axis=-1, keepdims=True)
                s2 = jnp.sum(y * y, axis=-1, keepdims=True)
                mean = s1 * inv_h
                var = s2 * inv_h - mean * mean
                y_hat = (y - mean) * jax.lax.rsqrt(var + LN_EPS)
                y_hat = y_hat * g_ref[...] + be_ref[...]
                h = h + jnp.maximum(y_hat, 0.0)

            # Output projection; wo/bo were zero-padded to 128 lanes so the
            # store is an unmasked lane-dense vst.
            out_ref[...] = (jnp.dot(h.astype(jnp.bfloat16), wo_ref[...],
                                    preferred_element_type=jnp.float32)
                            + bo_ref[...]).astype(out_ref.dtype)

    return kernel


def init_params(key, input_size: int, hidden_dim: int, num_classes: int,
                num_layers: int):
    """Deterministic synthetic parameters (shapes match the torch module)."""
    num_blocks = num_layers - 1
    keys = jax.random.split(key, 2 + 2 * num_blocks + 2)
    params = {}
    k = iter(keys)
    params["w0"] = jax.random.normal(next(k), (input_size, hidden_dim),
                                     jnp.float32) * 0.02
    params["b0"] = jax.random.normal(next(k), (1, hidden_dim),
                                     jnp.float32) * 0.01
    params["blocks"] = []
    for _ in range(num_blocks):
        w = jax.random.normal(next(k), (hidden_dim, hidden_dim),
                              jnp.float32) * 0.05
        b = jax.random.normal(next(k), (1, hidden_dim), jnp.float32) * 0.01
        gamma = jnp.ones((1, hidden_dim), jnp.float32)
        beta = jnp.zeros((1, hidden_dim), jnp.float32)
        params["blocks"].append((w, b, gamma, beta))
    params["wo"] = jax.random.normal(next(k), (hidden_dim, num_classes),
                                     jnp.float32) * 0.05
    params["bo"] = jax.random.normal(next(k), (1, num_classes),
                                     jnp.float32) * 0.01
    return params


@functools.partial(
    jax.jit,
    static_argnames=("num_layers", "tb", "tk", "b_pad", "in_pad", "out_pad",
                     "vmem_limit"))
def _mlp_forward_impl(x, params, *, num_layers, tb, tk, b_pad, in_pad,
                      out_pad, vmem_limit):
    b = x.shape[0]
    num_blocks = num_layers - 1
    input_size = x.shape[1] * x.shape[2] * x.shape[3]
    hidden_dim = params["w0"].shape[1]
    num_classes = params["wo"].shape[1]

    # Glue: flatten exactly like torch's x.view(b, -1), then zero-pad batch
    # (to a TB multiple) and feature dim (to a TK multiple); zero columns do
    # not change the matmul result.  Matmul operands go to bf16.
    x_flat = x.reshape(b, input_size)
    x_flat = jnp.pad(x_flat, ((0, b_pad - b), (0, in_pad - input_size)))
    x_bf16 = x_flat.astype(jnp.bfloat16)

    w0 = jnp.pad(params["w0"],
                 ((0, in_pad - input_size), (0, 0))).astype(jnp.bfloat16)
    b0 = params["b0"]  # f32

    # Lane-dense output projection: pad wo/bo with zeros out to 128 lanes.
    wo = jnp.pad(params["wo"],
                 ((0, 0), (0, out_pad - num_classes))).astype(jnp.bfloat16)
    bo = jnp.pad(params["bo"], ((0, 0), (0, out_pad - num_classes)))  # f32

    # Flat input list: x, w0, b0, block params..., wo, bo
    inputs = [x_bf16, w0, b0]
    for w, bi, g, be in params["blocks"]:
        inputs.extend([w.astype(jnp.bfloat16), bi, g, be])
    inputs.extend([wo, bo])

    kernel = _make_kernel(num_blocks, hidden_dim)

    # BlockSpecs: batch tiled over grid axis 0 (parallel, feeds both v7x TCs),
    # input-feature dim tiled over grid axis 1 (reduction, "arbitrary");
    # every other parameter is a small full-array block at a constant index.
    def const_spec(arr):
        nd = arr.ndim
        return pl.BlockSpec(arr.shape, lambda i, k, _nd=nd: (0,) * _nd)

    in_specs = [
        pl.BlockSpec((tb, tk), lambda i, k: (i, k)),          # x
        pl.BlockSpec((tk, hidden_dim), lambda i, k: (k, 0)),  # w0
    ]
    in_specs += [const_spec(a) for a in inputs[2:]]

    # Advisory cost estimate (bf16 bytes for x/W0; W0 counted once).
    flops = 2 * b_pad * (in_pad * hidden_dim
                         + num_blocks * hidden_dim * hidden_dim
                         + hidden_dim * out_pad)
    small_param_bytes = sum(int(a.size) * a.dtype.itemsize for a in inputs[2:])
    bytes_accessed = (b_pad * in_pad * 2 + in_pad * hidden_dim * 2
                      + small_param_bytes + b_pad * out_pad * 4)
    cost = pl.CostEstimate(flops=flops,
                           transcendentals=b_pad * num_blocks,
                           bytes_accessed=bytes_accessed)

    out = pl.pallas_call(
        kernel,
        out_shape=jax.ShapeDtypeStruct((b_pad, out_pad), jnp.float32),
        grid_spec=pltpu.PrefetchScalarGridSpec(
            num_scalar_prefetch=0,
            grid=(b_pad // tb, in_pad // tk),
            in_specs=in_specs,
            out_specs=pl.BlockSpec((tb, out_pad), lambda i, k: (i, 0)),
            scratch_shapes=[pltpu.VMEM((tb, hidden_dim), jnp.float32)],
        ),
        compiler_params=pltpu.CompilerParams(
            dimension_semantics=("parallel", "arbitrary"),
            vmem_limit_bytes=vmem_limit,
        ),
        cost_estimate=cost,
    )(*inputs)

    return out[:b, :num_classes]


def mlp_forward(x, params, *, num_layers: int = 4):
    """x: (b, 3, H, W) float32 -> logits (b, num_classes)."""
    b = x.shape[0]
    input_size = x.shape[1] * x.shape[2] * x.shape[3]
    hidden_dim = params["w0"].shape[1]
    num_classes = params["wo"].shape[1]
    num_blocks = num_layers - 1

    # Lane-dense output width (>= 128).
    out_pad = _round_up(max(num_classes, LANE), LANE)

    # K tiling: pad feature dim to a multiple of 128; if it exceeds the target
    # K tile, pad to a multiple of TK and iterate the reduction on the grid.
    in_pad128 = _round_up(input_size, LANE)
    if in_pad128 <= TK_TARGET:
        tk = in_pad128
        in_pad = in_pad128
    else:
        tk = TK_TARGET
        in_pad = _round_up(input_size, tk)

    # Generation-aware VMEM budget (v5e/v6e 128 MiB, v7x 64 MiB per TC).
    vmem_cap = _vmem_capacity_bytes()
    vmem_limit = int(min(max(32 * 1024 * 1024, int(0.75 * vmem_cap)),
                         100 * 1024 * 1024))

    # Batch tiling: largest sublane-aligned TB whose per-step footprint fits
    # the budget, while keeping >=2 batch steps when possible so v7x's second
    # TensorCore gets work on the "parallel" axis.
    b_pad8 = _round_up(b, SUBLANE)
    tb_cap = b_pad8
    if b_pad8 >= 2 * SUBLANE:
        tb_cap = _round_up((b_pad8 + 1) // 2, SUBLANE)

    # Small params are double-buffered by the default pipeline; count them x2.
    small_param_bytes = 2 * (
        hidden_dim * 4                                           # b0
        + num_blocks * (hidden_dim * hidden_dim * 2              # block W bf16
                        + 3 * hidden_dim * 4)                    # b, gamma, beta
        + hidden_dim * out_pad * 2                               # wo bf16
        + out_pad * 4)                                           # bo

    def footprint(tb_c: int) -> int:
        x_buf = 2 * tb_c * tk * 2          # double-buffered bf16 x tile
        w0_buf = 2 * tk * hidden_dim * 2   # double-buffered bf16 W0 tile
        out_buf = 2 * tb_c * out_pad * 4   # double-buffered f32 out tile
        acc = tb_c * hidden_dim * 4        # f32 accumulator scratch
        work = 4 * tb_c * hidden_dim * 4   # live f32 temporaries in epilogue
        return x_buf + w0_buf + out_buf + acc + work + small_param_bytes

    tb = SUBLANE
    for cand in (1024, 512, 256, 128, 64, 32, 16, 8):
        if cand <= tb_cap and footprint(cand) <= int(0.8 * vmem_limit):
            tb = cand
            break
    tb = min(tb, tb_cap)
    b_pad = _round_up(b, tb)

    return _mlp_forward_impl(x, params, num_layers=num_layers, tb=tb, tk=tk,
                             b_pad=b_pad, in_pad=in_pad, out_pad=out_pad,
                             vmem_limit=vmem_limit)


def mlp_forward_ref(x, params):
    """Pure-JAX f32 reference mirroring the torch forward, for validation."""
    b = x.shape[0]
    h = x.reshape(b, -1) @ params["w0"] + params["b0"]
    for w, bi, g, be in params["blocks"]:
        y = h @ w + bi
        mean = jnp.mean(y, axis=-1, keepdims=True)
        var = jnp.mean((y - mean) ** 2, axis=-1, keepdims=True)
        y_hat = (y - mean) / jnp.sqrt(var + LN_EPS) * g + be
        h = h + jnp.maximum(y_hat, 0.0)
    return h @ params["wo"] + params["bo"]


if __name__ == "__main__":
    # Small shapes consistent with the module: image (b, 3, H, W).
    B, C, H, W = 2, 3, 16, 16
    HIDDEN, NUM_CLASSES, NUM_LAYERS = 128, 6, 4

    key = jax.random.PRNGKey(0)
    kx, kp = jax.random.split(key)
    x = jax.random.normal(kx, (B, C, H, W), jnp.float32)
    params = init_params(kp, C * H * W, HIDDEN, NUM_CLASSES, NUM_LAYERS)

    logits = mlp_forward(x, params, num_layers=NUM_LAYERS)
    logits = jax.block_until_ready(logits)

    ref = mlp_forward_ref(x, params)
    assert logits.shape == (B, NUM_CLASSES)
    # bf16 matmul operands (f32 accumulation) -> slightly looser tolerance
    # than the pure-f32 reference.
    assert jnp.allclose(logits, ref, atol=5e-2, rtol=5e-2), (
        "Pallas output mismatch vs reference")

    print("KERNEL_OK")
</pallas_src>

<mosaic_0001>
module attributes {stable_mosaic.version = 11 : i64} {
  func.func @kernel(%arg0: i32, %arg1: i32, %arg2: memref<8x768xbf16, #tpu.memory_space<vmem>>, %arg3: memref<768x128xbf16, #tpu.memory_space<vmem>>, %arg4: memref<1x128xf32, #tpu.memory_space<vmem>>, %arg5: memref<128x128xbf16, #tpu.memory_space<vmem>>, %arg6: memref<1x128xf32, #tpu.memory_space<vmem>>, %arg7: memref<1x128xf32, #tpu.memory_space<vmem>>, %arg8: memref<1x128xf32, #tpu.memory_space<vmem>>, %arg9: memref<128x128xbf16, #tpu.memory_space<vmem>>, %arg10: memref<1x128xf32, #tpu.memory_space<vmem>>, %arg11: memref<1x128xf32, #tpu.memory_space<vmem>>, %arg12: memref<1x128xf32, #tpu.memory_space<vmem>>, %arg13: memref<128x128xbf16, #tpu.memory_space<vmem>>, %arg14: memref<1x128xf32, #tpu.memory_space<vmem>>, %arg15: memref<1x128xf32, #tpu.memory_space<vmem>>, %arg16: memref<1x128xf32, #tpu.memory_space<vmem>>, %arg17: memref<128x128xbf16, #tpu.memory_space<vmem>>, %arg18: memref<1x128xf32, #tpu.memory_space<vmem>>, %arg19: memref<8x128xf32, #tpu.memory_space<vmem>>, %arg20: memref<8x128xf32, #tpu.memory_space<vmem>>) attributes {dimension_semantics = [#tpu.dimension_semantics<parallel>, #tpu.dimension_semantics<arbitrary>], iteration_bounds = array<i64: 1, 1>, scalar_prefetch = 0 : i64, scratch_operands = 1 : i64, tpu.core_type = #tpu.core_type<tc>, window_params = [{transform_indices = @transform_0, window_bounds = array<i64: 8, 768>}, {transform_indices = @transform_1, window_bounds = array<i64: 768, 128>}, {pipeline_mode = #tpu.pipeline_mode<synchronous>, transform_indices = @transform_2, window_bounds = array<i64: 1, 128>}, {pipeline_mode = #tpu.pipeline_mode<synchronous>, transform_indices = @transform_3, window_bounds = array<i64: 128, 128>}, {pipeline_mode = #tpu.pipeline_mode<synchronous>, transform_indices = @transform_4, window_bounds = array<i64: 1, 128>}, {pipeline_mode = #tpu.pipeline_mode<synchronous>, transform_indices = @transform_5, window_bounds = array<i64: 1, 128>}, {pipeline_mode = #tpu.pipeline_mode<synchronous>, transform_indices = @transform_6, window_bounds = array<i64: 1, 128>}, {pipeline_mode = #tpu.pipeline_mode<synchronous>, transform_indices = @transform_7, window_bounds = array<i64: 128, 128>}, {pipeline_mode = #tpu.pipeline_mode<synchronous>, transform_indices = @transform_8, window_bounds = array<i64: 1, 128>}, {pipeline_mode = #tpu.pipeline_mode<synchronous>, transform_indices = @transform_9, window_bounds = array<i64: 1, 128>}, {pipeline_mode = #tpu.pipeline_mode<synchronous>, transform_indices = @transform_10, window_bounds = array<i64: 1, 128>}, {pipeline_mode = #tpu.pipeline_mode<synchronous>, transform_indices = @transform_11, window_bounds = array<i64: 128, 128>}, {pipeline_mode = #tpu.pipeline_mode<synchronous>, transform_indices = @transform_12, window_bounds = array<i64: 1, 128>}, {pipeline_mode = #tpu.pipeline_mode<synchronous>, transform_indices = @transform_13, window_bounds = array<i64: 1, 128>}, {pipeline_mode = #tpu.pipeline_mode<synchronous>, transform_indices = @transform_14, window_bounds = array<i64: 1, 128>}, {pipeline_mode = #tpu.pipeline_mode<synchronous>, transform_indices = @transform_15, window_bounds = array<i64: 128, 128>}, {pipeline_mode = #tpu.pipeline_mode<synchronous>, transform_indices = @transform_16, window_bounds = array<i64: 1, 128>}, {transform_indices = @transform_17, window_bounds = array<i64: 8, 128>}]} {
    %c0_i32 = arith.constant 0 : i32
    %0 = arith.cmpi eq, %arg1, %c0_i32 : i32
    %1 = arith.extui %0 : i1 to i32
    %c0_i32_0 = arith.constant 0 : i32
    %2 = arith.cmpi ne, %1, %c0_i32_0 : i32
    scf.if %2 {
      %cst_10 = arith.constant 0.000000e+00 : f32
      %12 = vector.broadcast %cst_10 : f32 to vector<8x128xf32>
      %c0_11 = arith.constant 0 : index
      %c0_12 = arith.constant 0 : index
      %13 = vector.load %arg20[%c0_11, %c0_12] : memref<8x128xf32, #tpu.memory_space<vmem>>, vector<8x128xf32>
      tpu.vector_store %arg20[%c0_11, %c0_12], %12 {strides = array<i32>} : memref<8x128xf32, #tpu.memory_space<vmem>>, vector<8x128xf32>,
    } else {
    }
    %c0 = arith.constant 0 : index
    %c0_1 = arith.constant 0 : index
    %3 = vector.load %arg20[%c0, %c0_1] : memref<8x128xf32, #tpu.memory_space<vmem>>, vector<8x128xf32>
    %c0_2 = arith.constant 0 : index
    %c0_3 = arith.constant 0 : index
    %4 = vector.load %arg2[%c0_2, %c0_3] : memref<8x768xbf16, #tpu.memory_space<vmem>>, vector<8x768xbf16>
    %c0_4 = arith.constant 0 : index
    %c0_5 = arith.constant 0 : index
    %5 = vector.load %arg3[%c0_4, %c0_5] : memref<768x128xbf16, #tpu.memory_space<vmem>>, vector<768x128xbf16>
    %cst = arith.constant dense<0.000000e+00> : vector<8x128xf32>
    %6 = tpu.matmul %4, %5, %cst {dimension_numbers = #tpu.dot_dimension_numbers<[1], [0], [0], [1], [0, 0, 1, 1], [], []>} : vector<8x768xbf16>, vector<768x128xbf16>, vector<8x128xf32> -> vector<8x128xf32>
    %7 = arith.addf %3, %6 : vector<8x128xf32>
    %c0_6 = arith.constant 0 : index
    %c0_7 = arith.constant 0 : index
    %8 = vector.load %arg20[%c0_6, %c0_7] : memref<8x128xf32, #tpu.memory_space<vmem>>, vector<8x128xf32>
    tpu.vector_store %arg20[%c0_6, %c0_7], %7 {strides = array<i32>} : memref<8x128xf32, #tpu.memory_space<vmem>>, vector<8x128xf32>,
    %c0_i32_8 = arith.constant 0 : i32
    %9 = arith.cmpi eq, %arg1, %c0_i32_8 : i32
    %10 = arith.extui %9 : i1 to i32
    %c0_i32_9 = arith.constant 0 : i32
    %11 = arith.cmpi ne, %10, %c0_i32_9 : i32
    scf.if %11 {
      %c0_10 = arith.constant 0 : index
      %c0_11 = arith.constant 0 : index
      %12 = vector.load %arg20[%c0_10, %c0_11] : memref<8x128xf32, #tpu.memory_space<vmem>>, vector<8x128xf32>
      %c0_12 = arith.constant 0 : index
      %c0_13 = arith.constant 0 : index
      %13 = vector.load %arg4[%c0_12, %c0_13] : memref<1x128xf32, #tpu.memory_space<vmem>>, vector<1x128xf32>
      %14 = vector.broadcast %13 : vector<1x128xf32> to vector<8x128xf32>
      %15 = arith.addf %12, %14 : vector<8x128xf32>
      %16 = arith.truncf %15 : vector<8x128xf32> to vector<8x128xbf16>
      %c0_14 = arith.constant 0 : index
      %c0_15 = arith.constant 0 : index
      %17 = vector.load %arg5[%c0_14, %c0_15] : memref<128x128xbf16, #tpu.memory_space<vmem>>, vector<128x128xbf16>
      %cst_16 = arith.constant dense<0.000000e+00> : vector<8x128xf32>
      %18 = tpu.matmul %16, %17, %cst_16 {dimension_numbers = #tpu.dot_dimension_numbers<[1], [0], [0], [1], [0, 0, 1, 1], [], []>} : vector<8x128xbf16>, vector<128x128xbf16>, vector<8x128xf32> -> vector<8x128xf32>
      %c0_17 = arith.constant 0 : index
      %c0_18 = arith.constant 0 : index
      %19 = vector.load %arg6[%c0_17, %c0_18] : memref<1x128xf32, #tpu.memory_space<vmem>>, vector<1x128xf32>
      %20 = vector.broadcast %19 : vector<1x128xf32> to vector<8x128xf32>
      %21 = arith.addf %18, %20 : vector<8x128xf32>
      %cst_19 = arith.constant dense<0.000000e+00> : vector<8xf32>
      %22 = vector.multi_reduction <add>, %21, %cst_19 [1] : vector<8x128xf32> to vector<8xf32>
      %23 = vector.shape_cast %22 : vector<8xf32> to vector<8x1xf32>
      %24 = arith.mulf %21, %21 : vector<8x128xf32>
      %cst_20 = arith.constant dense<0.000000e+00> : vector<8xf32>
      %25 = vector.multi_reduction <add>, %24, %cst_20 [1] : vector<8x128xf32> to vector<8xf32>
      %26 = vector.shape_cast %25 : vector<8xf32> to vector<8x1xf32>
      %cst_21 = arith.constant 7.812500e-03 : f32
      %27 = vector.broadcast %cst_21 : f32 to vector<8x1xf32>
      %28 = arith.mulf %23, %27 : vector<8x1xf32>
      %cst_22 = arith.constant 7.812500e-03 : f32
      %29 = vector.broadcast %cst_22 : f32 to vector<8x1xf32>
      %30 = arith.mulf %26, %29 : vector<8x1xf32>
      %31 = arith.mulf %28, %28 : vector<8x1xf32>
      %32 = arith.subf %30, %31 : vector<8x1xf32>
      %33 = vector.broadcast %28 : vector<8x1xf32> to vector<8x128xf32>
      %34 = arith.subf %21, %33 : vector<8x128xf32>
      %cst_23 = arith.constant 9.99999974E-6 : f32
      %35 = vector.broadcast %cst_23 : f32 to vector<8x1xf32>
      %36 = arith.addf %32, %35 : vector<8x1xf32>
      %37 = math.rsqrt %36 : vector<8x1xf32>
      %38 = vector.broadcast %37 : vector<8x1xf32> to vector<8x128xf32>
      %39 = arith.mulf %34, %38 : vector<8x128xf32>
      %c0_24 = arith.constant 0 : index
      %c0_25 = arith.constant 0 : index
      %40 = vector.load %arg7[%c0_24, %c0_25] : memref<1x128xf32, #tpu.memory_space<vmem>>, vector<1x128xf32>
      %41 = vector.broadcast %40 : vector<1x128xf32> to vector<8x128xf32>
      %42 = arith.mulf %39, %41 : vector<8x128xf32>
      %c0_26 = arith.constant 0 : index
      %c0_27 = arith.constant 0 : index
      %43 = vector.load %arg8[%c0_26, %c0_27] : memref<1x128xf32, #tpu.memory_space<vmem>>, vector<1x128xf32>
      %44 = vector.broadcast %43 : vector<1x128xf32> to vector<8x128xf32>
      %45 = arith.addf %42, %44 : vector<8x128xf32>
      %cst_28 = arith.constant 0.000000e+00 : f32
      %46 = vector.broadcast %cst_28 : f32 to vector<8x128xf32>
      %47 = arith.maximumf %45, %46 : vector<8x128xf32>
      %48 = arith.addf %15, %47 : vector<8x128xf32>
      %49 = arith.truncf %48 : vector<8x128xf32> to vector<8x128xbf16>
      %c0_29 = arith.constant 0 : index
      %c0_30 = arith.constant 0 : index
      %50 = vector.load %arg9[%c0_29, %c0_30] : memref<128x128xbf16, #tpu.memory_space<vmem>>, vector<128x128xbf16>
      %cst_31 = arith.constant dense<0.000000e+00> : vector<8x128xf32>
      %51 = tpu.matmul %49, %50, %cst_31 {dimension_numbers = #tpu.dot_dimension_numbers<[1], [0], [0], [1], [0, 0, 1, 1], [], []>} : vector<8x128xbf16>, vector<128x128xbf16>, vector<8x128xf32> -> vector<8x128xf32>
      %c0_32 = arith.constant 0 : index
      %c0_33 = arith.constant 0 : index
      %52 = vector.load %arg10[%c0_32, %c0_33] : memref<1x128xf32, #tpu.memory_space<vmem>>, vector<1x128xf32>
      %53 = vector.broadcast %52 : vector<1x128xf32> to vector<8x128xf32>
      %54 = arith.addf %51, %53 : vector<8x128xf32>
      %cst_34 = arith.constant dense<0.000000e+00> : vector<8xf32>
      %55 = vector.multi_reduction <add>, %54, %cst_34 [1] : vector<8x128xf32> to vector<8xf32>
      %56 = vector.shape_cast %55 : vector<8xf32> to vector<8x1xf32>
      %57 = arith.mulf %54, %54 : vector<8x128xf32>
      %cst_35 = arith.constant dense<0.000000e+00> : vector<8xf32>
      %58 = vector.multi_reduction <add>, %57, %cst_35 [1] : vector<8x128xf32> to vector<8xf32>
      %59 = vector.shape_cast %58 : vector<8xf32> to vector<8x1xf32>
      %cst_36 = arith.constant 7.812500e-03 : f32
      %60 = vector.broadcast %cst_36 : f32 to vector<8x1xf32>
      %61 = arith.mulf %56, %60 : vector<8x1xf32>
      %cst_37 = arith.constant 7.812500e-03 : f32
      %62 = vector.broadcast %cst_37 : f32 to vector<8x1xf32>
      %63 = arith.mulf %59, %62 : vector<8x1xf32>
      %64 = arith.mulf %61, %61 : vector<8x1xf32>
      %65 = arith.subf %63, %64 : vector<8x1xf32>
      %66 = vector.broadcast %61 : vector<8x1xf32> to vector<8x128xf32>
      %67 = arith.subf %54, %66 : vector<8x128xf32>
      %cst_38 = arith.constant 9.99999974E-6 : f32
      %68 = vector.broadcast %cst_38 : f32 to vector<8x1xf32>
      %69 = arith.addf %65, %68 : vector<8x1xf32>
      %70 = math.rsqrt %69 : vector<8x1xf32>
      %71 = vector.broadcast %70 : vector<8x1xf32> to vector<8x128xf32>
      %72 = arith.mulf %67, %71 : vector<8x128xf32>
      %c0_39 = arith.constant 0 : index
      %c0_40 = arith.constant 0 : index
      %73 = vector.load %arg11[%c0_39, %c0_40] : memref<1x128xf32, #tpu.memory_space<vmem>>, vector<1x128xf32>
      %74 = vector.broadcast %73 : vector<1x128xf32> to vector<8x128xf32>
      %75 = arith.mulf %72, %74 : vector<8x128xf32>
      %c0_41 = arith.constant 0 : index
      %c0_42 = arith.constant 0 : index
      %76 = vector.load %arg12[%c0_41, %c0_42] : memref<1x128xf32, #tpu.memory_space<vmem>>, vector<1x128xf32>
      %77 = vector.broadcast %76 : vector<1x128xf32> to vector<8x128xf32>
      %78 = arith.addf %75, %77 : vector<8x128xf32>
      %cst_43 = arith.constant 0.000000e+00 : f32
      %79 = vector.broadcast %cst_43 : f32 to vector<8x128xf32>
      %80 = arith.maximumf %78, %79 : vector<8x128xf32>
      %81 = arith.addf %48, %80 : vector<8x128xf32>
      %82 = arith.truncf %81 : vector<8x128xf32> to vector<8x128xbf16>
      %c0_44 = arith.constant 0 : index
      %c0_45 = arith.constant 0 : index
      %83 = vector.load %arg13[%c0_44, %c0_45] : memref<128x128xbf16, #tpu.memory_space<vmem>>, vector<128x128xbf16>
      %cst_46 = arith.constant dense<0.000000e+00> : vector<8x128xf32>
      %84 = tpu.matmul %82, %83, %cst_46 {dimension_numbers = #tpu.dot_dimension_numbers<[1], [0], [0], [1], [0, 0, 1, 1], [], []>} : vector<8x128xbf16>, vector<128x128xbf16>, vector<8x128xf32> -> vector<8x128xf32>
      %c0_47 = arith.constant 0 : index
      %c0_48 = arith.constant 0 : index
      %85 = vector.load %arg14[%c0_47, %c0_48] : memref<1x128xf32, #tpu.memory_space<vmem>>, vector<1x128xf32>
      %86 = vector.broadcast %85 : vector<1x128xf32> to vector<8x128xf32>
      %87 = arith.addf %84, %86 : vector<8x128xf32>
      %cst_49 = arith.constant dense<0.000000e+00> : vector<8xf32>
      %88 = vector.multi_reduction <add>, %87, %cst_49 [1] : vector<8x128xf32> to vector<8xf32>
      %89 = vector.shape_cast %88 : vector<8xf32> to vector<8x1xf32>
      %90 = arith.mulf %87, %87 : vector<8x128xf32>
      %cst_50 = arith.constant dense<0.000000e+00> : vector<8xf32>
      %91 = vector.multi_reduction <add>, %90, %cst_50 [1] : vector<8x128xf32> to vector<8xf32>
      %92 = vector.shape_cast %91 : vector<8xf32> to vector<8x1xf32>
      %cst_51 = arith.constant 7.812500e-03 : f32
      %93 = vector.broadcast %cst_51 : f32 to vector<8x1xf32>
      %94 = arith.mulf %89, %93 : vector<8x1xf32>
      %cst_52 = arith.constant 7.812500e-03 : f32
      %95 = vector.broadcast %cst_52 : f32 to vector<8x1xf32>
      %96 = arith.mulf %92, %95 : vector<8x1xf32>
      %97 = arith.mulf %94, %94 : vector<8x1xf32>
      %98 = arith.subf %96, %97 : vector<8x1xf32>
      %99 = vector.broadcast %94 : vector<8x1xf32> to vector<8x128xf32>
      %100 = arith.subf %87, %99 : vector<8x128xf32>
      %cst_53 = arith.constant 9.99999974E-6 : f32
      %101 = vector.broadcast %cst_53 : f32 to vector<8x1xf32>
      %102 = arith.addf %98, %101 : vector<8x1xf32>
      %103 = math.rsqrt %102 : vector<8x1xf32>
      %104 = vector.broadcast %103 : vector<8x1xf32> to vector<8x128xf32>
      %105 = arith.mulf %100, %104 : vector<8x128xf32>
      %c0_54 = arith.constant 0 : index
      %c0_55 = arith.constant 0 : index
      %106 = vector.load %arg15[%c0_54, %c0_55] : memref<1x128xf32, #tpu.memory_space<vmem>>, vector<1x128xf32>
      %107 = vector.broadcast %106 : vector<1x128xf32> to vector<8x128xf32>
      %108 = arith.mulf %105, %107 : vector<8x128xf32>
      %c0_56 = arith.constant 0 : index
      %c0_57 = arith.constant 0 : index
      %109 = vector.load %arg16[%c0_56, %c0_57] : memref<1x128xf32, #tpu.memory_space<vmem>>, vector<1x128xf32>
      %110 = vector.broadcast %109 : vector<1x128xf32> to vector<8x128xf32>
      %111 = arith.addf %108, %110 : vector<8x128xf32>
      %cst_58 = arith.constant 0.000000e+00 : f32
      %112 = vector.broadcast %cst_58 : f32 to vector<8x128xf32>
      %113 = arith.maximumf %111, %112 : vector<8x128xf32>
      %114 = arith.addf %81, %113 : vector<8x128xf32>
      %115 = arith.truncf %114 : vector<8x128xf32> to vector<8x128xbf16>
      %c0_59 = arith.constant 0 : index
      %c0_60 = arith.constant 0 : index
      %116 = vector.load %arg17[%c0_59, %c0_60] : memref<128x128xbf16, #tpu.memory_space<vmem>>, vector<128x128xbf16>
      %cst_61 = arith.constant dense<0.000000e+00> : vector<8x128xf32>
      %117 = tpu.matmul %115, %116, %cst_61 {dimension_numbers = #tpu.dot_dimension_numbers<[1], [0], [0], [1], [0, 0, 1, 1], [], []>} : vector<8x128xbf16>, vector<128x128xbf16>, vector<8x128xf32> -> vector<8x128xf32>
      %c0_62 = arith.constant 0 : index
      %c0_63 = arith.constant 0 : index
      %118 = vector.load %arg18[%c0_62, %c0_63] : memref<1x128xf32, #tpu.memory_space<vmem>>, vector<1x128xf32>
      %119 = vector.broadcast %118 : vector<1x128xf32> to vector<8x128xf32>
      %120 = arith.addf %117, %119 : vector<8x128xf32>
      %c0_64 = arith.constant 0 : index
      %c0_65 = arith.constant 0 : index
      %121 = vector.load %arg19[%c0_64, %c0_65] : memref<8x128xf32, #tpu.memory_space<vmem>>, vector<8x128xf32>
      tpu.vector_store %arg19[%c0_64, %c0_65], %120 {strides = array<i32>} : memref<8x128xf32, #tpu.memory_space<vmem>>, vector<8x128xf32>,
    } else {
    }
    return
  }
  func.func @transform_0(%arg0: i32, %arg1: i32) -> (i32, i32) {
    %c0_i32 = arith.constant 0 : i32
    return %arg0, %arg1 : i32, i32
  }
  func.func @transform_1(%arg0: i32, %arg1: i32) -> (i32, i32) {
    %c0_i32 = arith.constant 0 : i32
    %c0_i32_0 = arith.constant 0 : i32
    return %arg1, %c0_i32 : i32, i32
  }
  func.func @transform_2(%arg0: i32, %arg1: i32) -> (i32, i32) {
    %c0_i32 = arith.constant 0 : i32
    %c0_i32_0 = arith.constant 0 : i32
    %c0_i32_1 = arith.constant 0 : i32
    return %c0_i32, %c0_i32_0 : i32, i32
  }
  func.func @transform_3(%arg0: i32, %arg1: i32) -> (i32, i32) {
    %c0_i32 = arith.constant 0 : i32
    %c0_i32_0 = arith.constant 0 : i32
    %c0_i32_1 = arith.constant 0 : i32
    return %c0_i32, %c0_i32_0 : i32, i32
  }
  func.func @transform_4(%arg0: i32, %arg1: i32) -> (i32, i32) {
    %c0_i32 = arith.constant 0 : i32
    %c0_i32_0 = arith.constant 0 : i32
    %c0_i32_1 = arith.constant 0 : i32
    return %c0_i32, %c0_i32_0 : i32, i32
  }
  func.func @transform_5(%arg0: i32, %arg1: i32) -> (i32, i32) {
    %c0_i32 = arith.constant 0 : i32
    %c0_i32_0 = arith.constant 0 : i32
    %c0_i32_1 = arith.constant 0 : i32
    return %c0_i32, %c0_i32_0 : i32, i32
  }
  func.func @transform_6(%arg0: i32, %arg1: i32) -> (i32, i32) {
    %c0_i32 = arith.constant 0 : i32
    %c0_i32_0 = arith.constant 0 : i32
    %c0_i32_1 = arith.constant 0 : i32
    return %c0_i32, %c0_i32_0 : i32, i32
  }
  func.func @transform_7(%arg0: i32, %arg1: i32) -> (i32, i32) {
    %c0_i32 = arith.constant 0 : i32
    %c0_i32_0 = arith.constant 0 : i32
    %c0_i32_1 = arith.constant 0 : i32
    return %c0_i32, %c0_i32_0 : i32, i32
  }
  func.func @transform_8(%arg0: i32, %arg1: i32) -> (i32, i32) {
    %c0_i32 = arith.constant 0 : i32
    %c0_i32_0 = arith.constant 0 : i32
    %c0_i32_1 = arith.constant 0 : i32
    return %c0_i32, %c0_i32_0 : i32, i32
  }
  func.func @transform_9(%arg0: i32, %arg1: i32) -> (i32, i32) {
    %c0_i32 = arith.constant 0 : i32
    %c0_i32_0 = arith.constant 0 : i32
    %c0_i32_1 = arith.constant 0 : i32
    return %c0_i32, %c0_i32_0 : i32, i32
  }
  func.func @transform_10(%arg0: i32, %arg1: i32) -> (i32, i32) {
    %c0_i32 = arith.constant 0 : i32
    %c0_i32_0 = arith.constant 0 : i32
    %c0_i32_1 = arith.constant 0 : i32
    return %c0_i32, %c0_i32_0 : i32, i32
  }
  func.func @transform_11(%arg0: i32, %arg1: i32) -> (i32, i32) {
    %c0_i32 = arith.constant 0 : i32
    %c0_i32_0 = arith.constant 0 : i32
    %c0_i32_1 = arith.constant 0 : i32
    return %c0_i32, %c0_i32_0 : i32, i32
  }
  func.func @transform_12(%arg0: i32, %arg1: i32) -> (i32, i32) {
    %c0_i32 = arith.constant 0 : i32
    %c0_i32_0 = arith.constant 0 : i32
    %c0_i32_1 = arith.constant 0 : i32
    return %c0_i32, %c0_i32_0 : i32, i32
  }
  func.func @transform_13(%arg0: i32, %arg1: i32) -> (i32, i32) {
    %c0_i32 = arith.constant 0 : i32
    %c0_i32_0 = arith.constant 0 : i32
    %c0_i32_1 = arith.constant 0 : i32
    return %c0_i32, %c0_i32_0 : i32, i32
  }
  func.func @transform_14(%arg0: i32, %arg1: i32) -> (i32, i32) {
    %c0_i32 = arith.constant 0 : i32
    %c0_i32_0 = arith.constant 0 : i32
    %c0_i32_1 = arith.constant 0 : i32
    return %c0_i32, %c0_i32_0 : i32, i32
  }
  func.func @transform_15(%arg0: i32, %arg1: i32) -> (i32, i32) {
    %c0_i32 = arith.constant 0 : i32
    %c0_i32_0 = arith.constant 0 : i32
    %c0_i32_1 = arith.constant 0 : i32
    return %c0_i32, %c0_i32_0 : i32, i32
  }
  func.func @transform_16(%arg0: i32, %arg1: i32) -> (i32, i32) {
    %c0_i32 = arith.constant 0 : i32
    %c0_i32_0 = arith.constant 0 : i32
    %c0_i32_1 = arith.constant 0 : i32
    return %c0_i32, %c0_i32_0 : i32, i32
  }
  func.func @transform_17(%arg0: i32, %arg1: i32) -> (i32, i32) {
    %c0_i32 = arith.constant 0 : i32
    %c0_i32_0 = arith.constant 0 : i32
    return %arg0, %c0_i32 : i32, i32
  }
}

</mosaic_0001>

<llo_original>
// kernel: _mlp_forward_impl.1
$region0: #{_mlp_forward_impl.1}
  #allocation0 [shape = 'u32[]', space=smem, size = 0x4, offset = 0x4, fixed_abs, tag = 'smem constant byte address 0x4 - core index']
  #allocation1 [shape = 'u32[144,128]{1,0:T(1,128)}', space=vmem, size = 0x12000, scoped, tag = 'internal scratch']
  #allocation2 [shape = 'f32[8,128]{1,0:T(8,128)}', space=vmem, size = 0x1000, scoped, tag = 'scratch operand']
  %s0 = inlined_call_operand.vmem [shape: bf16[8,768], index: 0, kind: input, shape index: {}]
  %s1 = inlined_call_operand.vmem [shape: bf16[768,128], index: 1, kind: input, shape index: {}]
  %s2 = inlined_call_operand.vmem [shape: f32[1,128], index: 2, kind: input, shape index: {}]
  %s3 = inlined_call_operand.vmem [shape: bf16[128,128], index: 3, kind: input, shape index: {}]
  %s4 = inlined_call_operand.vmem [shape: f32[1,128], index: 4, kind: input, shape index: {}]
  %s5 = inlined_call_operand.vmem [shape: f32[1,128], index: 5, kind: input, shape index: {}]
  %s6 = inlined_call_operand.vmem [shape: f32[1,128], index: 6, kind: input, shape index: {}]
  %s7 = inlined_call_operand.vmem [shape: bf16[128,128], index: 7, kind: input, shape index: {}]
  %s8 = inlined_call_operand.vmem [shape: f32[1,128], index: 8, kind: input, shape index: {}]
  %s9 = inlined_call_operand.vmem [shape: f32[1,128], index: 9, kind: input, shape index: {}]
  %s10 = inlined_call_operand.vmem [shape: f32[1,128], index: 10, kind: input, shape index: {}]
  %s11 = inlined_call_operand.vmem [shape: bf16[128,128], index: 11, kind: input, shape index: {}]
  %s12 = inlined_call_operand.vmem [shape: f32[1,128], index: 12, kind: input, shape index: {}]
  %s13 = inlined_call_operand.vmem [shape: f32[1,128], index: 13, kind: input, shape index: {}]
  %s14 = inlined_call_operand.vmem [shape: f32[1,128], index: 14, kind: input, shape index: {}]
  %s15 = inlined_call_operand.vmem [shape: bf16[128,128], index: 15, kind: input, shape index: {}]
  %s16 = inlined_call_operand.vmem [shape: f32[1,128], index: 16, kind: input, shape index: {}]
  %s17 = inlined_call_operand.vmem [shape: f32[8,128], index: 17, kind: output, shape index: {}]
  %s18 = sld [smem:[#allocation0]]
  $region86: #{_mlp_forward_impl.1} parent=0
    _
  %s20 = ssub.s32 1, %s18
  %s21 = scalar_select 0, %s20, %s18
  // Predicated region
  $region2: #{_mlp_forward_impl.1} parent=0 // pred_check
    _
  $region3: #{_mlp_forward_impl.1} parent=0 // pred_check_branch
    %23 = sbr.rel (0) target = $region5
  $region4: #{_mlp_forward_impl.1} parent=0 // pred_region
    _
  $region5: #{_mlp_forward_impl.1} parent=0 // pred_fallthru
    _
  // Predicated region
  $region6: #{_mlp_forward_impl.1} parent=0 // pred_check
    _
  $region7: #{_mlp_forward_impl.1} parent=0 // pred_check_branch
    %25 = sbr.rel (0) target = $region9
  $region8: #{_mlp_forward_impl.1} parent=0 // pred_region
    _
  $region9: #{_mlp_forward_impl.1} parent=0 // pred_fallthru
    _
  // Predicated region
  $region10: #{_mlp_forward_impl.1} parent=0 // pred_check
    _
  $region11: #{_mlp_forward_impl.1} parent=0 // pred_check_branch
    %27 = sbr.rel (0) target = $region13
  $region12: #{_mlp_forward_impl.1} parent=0 // pred_region
    _
  $region13: #{_mlp_forward_impl.1} parent=0 // pred_fallthru
    _
  // Predicated region
  $region14: #{_mlp_forward_impl.1} parent=0 // pred_check
    _
  $region15: #{_mlp_forward_impl.1} parent=0 // pred_check_branch
    %29 = sbr.rel (0) target = $region17
  $region16: #{_mlp_forward_impl.1} parent=0 // pred_region
    _
  $region17: #{_mlp_forward_impl.1} parent=0 // pred_fallthru
    _
  // Predicated region
  $region18: #{_mlp_forward_impl.1} parent=0 // pred_check
    _
  $region19: #{_mlp_forward_impl.1} parent=0 // pred_check_branch
    %31 = sbr.rel (0) target = $region21
  $region20: #{_mlp_forward_impl.1} parent=0 // pred_region
    _
  $region21: #{_mlp_forward_impl.1} parent=0 // pred_fallthru
    _
  // Predicated region
  $region22: #{_mlp_forward_impl.1} parent=0 // pred_check
    _
  $region23: #{_mlp_forward_impl.1} parent=0 // pred_check_branch
    %33 = sbr.rel (0) target = $region25
  $region24: #{_mlp_forward_impl.1} parent=0 // pred_region
    _
  $region25: #{_mlp_forward_impl.1} parent=0 // pred_fallthru
    _
  // Predicated region
  $region26: #{_mlp_forward_impl.1} parent=0 // pred_check
    _
  $region27: #{_mlp_forward_impl.1} parent=0 // pred_check_branch
    %35 = sbr.rel (0) target = $region29
  $region28: #{_mlp_forward_impl.1} parent=0 // pred_region
    _
  $region29: #{_mlp_forward_impl.1} parent=0 // pred_fallthru
    _
  // Predicated region
  $region30: #{_mlp_forward_impl.1} parent=0 // pred_check
    _
  $region31: #{_mlp_forward_impl.1} parent=0 // pred_check_branch
    %37 = sbr.rel (0) target = $region33
  $region32: #{_mlp_forward_impl.1} parent=0 // pred_region
    _
  $region33: #{_mlp_forward_impl.1} parent=0 // pred_fallthru
    _
  // Predicated region
  $region34: #{_mlp_forward_impl.1} parent=0 // pred_check
    _
  $region35: #{_mlp_forward_impl.1} parent=0 // pred_check_branch
    %39 = sbr.rel (0) target = $region37
  $region36: #{_mlp_forward_impl.1} parent=0 // pred_region
    _
  $region37: #{_mlp_forward_impl.1} parent=0 // pred_fallthru
    _
  // Predicated region
  $region38: #{_mlp_forward_impl.1} parent=0 // pred_check
    _
  $region39: #{_mlp_forward_impl.1} parent=0 // pred_check_branch
    %41 = sbr.rel (0) target = $region41
  $region40: #{_mlp_forward_impl.1} parent=0 // pred_region
    _
  $region41: #{_mlp_forward_impl.1} parent=0 // pred_fallthru
    _
  // Predicated region
  $region42: #{_mlp_forward_impl.1} parent=0 // pred_check
    _
  $region43: #{_mlp_forward_impl.1} parent=0 // pred_check_branch
    %43 = sbr.rel (0) target = $region45
  $region44: #{_mlp_forward_impl.1} parent=0 // pred_region
    _
  $region45: #{_mlp_forward_impl.1} parent=0 // pred_fallthru
    _
  // Predicated region
  $region46: #{_mlp_forward_impl.1} parent=0 // pred_check
    _
  $region47: #{_mlp_forward_impl.1} parent=0 // pred_check_branch
    %45 = sbr.rel (0) target = $region49
  $region48: #{_mlp_forward_impl.1} parent=0 // pred_region
    _
  $region49: #{_mlp_forward_impl.1} parent=0 // pred_fallthru
    _
  // Predicated region
  $region50: #{_mlp_forward_impl.1} parent=0 // pred_check
    _
  $region51: #{_mlp_forward_impl.1} parent=0 // pred_check_branch
    %47 = sbr.rel (0) target = $region53
  $region52: #{_mlp_forward_impl.1} parent=0 // pred_region
    _
  $region53: #{_mlp_forward_impl.1} parent=0 // pred_fallthru
    _
  // Predicated region
  $region54: #{_mlp_forward_impl.1} parent=0 // pred_check
    _
  $region55: #{_mlp_forward_impl.1} parent=0 // pred_check_branch
    %49 = sbr.rel (0) target = $region57
  $region56: #{_mlp_forward_impl.1} parent=0 // pred_region
    _
  $region57: #{_mlp_forward_impl.1} parent=0 // pred_fallthru
    _
  // Predicated region
  $region58: #{_mlp_forward_impl.1} parent=0 // pred_check
    _
  $region59: #{_mlp_forward_impl.1} parent=0 // pred_check_branch
    %51 = sbr.rel (0) target = $region61
  $region60: #{_mlp_forward_impl.1} parent=0 // pred_region
    _
  $region61: #{_mlp_forward_impl.1} parent=0 // pred_fallthru
    _
  // Predicated region
  $region62: #{_mlp_forward_impl.1} parent=0 // pred_check
    _
  $region63: #{_mlp_forward_impl.1} parent=0 // pred_check_branch
    %53 = sbr.rel (0) target = $region65
  $region64: #{_mlp_forward_impl.1} parent=0 // pred_region
    _
  $region65: #{_mlp_forward_impl.1} parent=0 // pred_fallthru
    _
  // Predicated region
  $region66: #{_mlp_forward_impl.1} parent=0 // pred_check
    _
  $region67: #{_mlp_forward_impl.1} parent=0 // pred_check_branch
    %55 = sbr.rel (0) target = $region69
  $region68: #{_mlp_forward_impl.1} parent=0 // pred_region
    _
  $region69: #{_mlp_forward_impl.1} parent=0 // pred_fallthru
    _
  %p57 = scmp.eq.s32.totalorder 0, 0
  // Predicated region
  $region70: #{_mlp_forward_impl.1} parent=0 // pred_check
    %p58 = pneg %p57
  $region71: #{_mlp_forward_impl.1} parent=0 // pred_check_branch
    %60 = sbr.rel (%p58) target = $region73
  $region72: #{_mlp_forward_impl.1} parent=0 // pred_region
    %61 = vst [vmem:[#allocation2] sm:$0xff] 0.0
  $region73: #{_mlp_forward_impl.1} parent=0 // pred_fallthru
    _
  %v62 = vld [vmem:[#allocation2] sm:$0xff]
  %v63 = vld [vmem:[%s0] sm:$0xff]
  %v64 = vld [vmem:[%s0 + $0x8] sm:$0xff]
  %v65 = vld [vmem:[%s0 + $0x10] sm:$0xff]
  %v66 = vld [vmem:[%s1] sm:$0xf]
  %v67 = vld [vmem:[%s1 + $0x4] sm:$0xf]
  %v68 = vld [vmem:[%s1 + $0x8] sm:$0xf]
  %v69 = vld [vmem:[%s1 + $0xc] sm:$0xf]
  %v70 = vld [vmem:[%s1 + $0x10] sm:$0xf]
  %v71 = vld [vmem:[%s1 + $0x14] sm:$0xf]
  %v72 = vld [vmem:[%s1 + $0x18] sm:$0xf]
  %v73 = vld [vmem:[%s1 + $0x1c] sm:$0xf]
  %v74 = vld [vmem:[%s1 + $0x20] sm:$0xf]
  %v75 = vld [vmem:[%s1 + $0x24] sm:$0xf]
  %v76 = vld [vmem:[%s1 + $0x28] sm:$0xf]
  %v77 = vld [vmem:[%s1 + $0x2c] sm:$0xf]
  %v78 = vld [vmem:[%s1 + $0x30] sm:$0xf]
  %v79 = vld [vmem:[%s1 + $0x34] sm:$0xf]
  %v80 = vld [vmem:[%s1 + $0x38] sm:$0xf]
  %v81 = vld [vmem:[%s1 + $0x3c] sm:$0xf]
  %v82 = vld [vmem:[%s1 + $0x40] sm:$0xf]
  %v83 = vld [vmem:[%s1 + $0x44] sm:$0xf]
  %v84 = vld [vmem:[%s1 + $0x48] sm:$0xf]
  %v85 = vld [vmem:[%s1 + $0x4c] sm:$0xf]
  %v86 = vld [vmem:[%s1 + $0x50] sm:$0xf]
  %v87 = vld [vmem:[%s1 + $0x54] sm:$0xf]
  %v88 = vld [vmem:[%s1 + $0x58] sm:$0xf]
  %v89 = vld [vmem:[%s1 + $0x5c] sm:$0xf]
  %v90 = vld [vmem:[%s1 + $0x60] sm:$0xf]
  %v91 = vld [vmem:[%s1 + $0x64] sm:$0xf]
  %v92 = vld [vmem:[%s1 + $0x68] sm:$0xf]
  %v93 = vld [vmem:[%s1 + $0x6c] sm:$0xf]
  %v94 = vld [vmem:[%s1 + $0x70] sm:$0xf]
  %v95 = vld [vmem:[%s1 + $0x74] sm:$0xf]
  %v96 = vld [vmem:[%s1 + $0x78] sm:$0xf]
  %v97 = vld [vmem:[%s1 + $0x7c] sm:$0xf]
  %v98 = vld [vmem:[%s1 + $0x80] sm:$0xf]
  %v99 = vld [vmem:[%s1 + $0x84] sm:$0xf]
  %v100 = vld [vmem:[%s1 + $0x88] sm:$0xf]
  %v101 = vld [vmem:[%s1 + $0x8c] sm:$0xf]
  %v102 = vld [vmem:[%s1 + $0x90] sm:$0xf]
  %v103 = vld [vmem:[%s1 + $0x94] sm:$0xf]
  %v104 = vld [vmem:[%s1 + $0x98] sm:$0xf]
  %v105 = vld [vmem:[%s1 + $0x9c] sm:$0xf]
  %v106 = vld [vmem:[%s1 + $0xa0] sm:$0xf]
  %v107 = vld [vmem:[%s1 + $0xa4] sm:$0xf]
  %v108 = vld [vmem:[%s1 + $0xa8] sm:$0xf]
  %v109 = vld [vmem:[%s1 + $0xac] sm:$0xf]
  %v110 = vld [vmem:[%s1 + $0xb0] sm:$0xf]
  %v111 = vld [vmem:[%s1 + $0xb4] sm:$0xf]
  %v112 = vld [vmem:[%s1 + $0xb8] sm:$0xf]
  %v113 = vld [vmem:[%s1 + $0xbc] sm:$0xf]
  %v114 = vld [vmem:[%s1 + $0xc0] sm:$0xf]
  %v115 = vld [vmem:[%s1 + $0xc4] sm:$0xf]
  %v116 = vld [vmem:[%s1 + $0xc8] sm:$0xf]
  %v117 = vld [vmem:[%s1 + $0xcc] sm:$0xf]
  %v118 = vld [vmem:[%s1 + $0xd0] sm:$0xf]
  %v119 = vld [vmem:[%s1 + $0xd4] sm:$0xf]
  %v120 = vld [vmem:[%s1 + $0xd8] sm:$0xf]
  %v121 = vld [vmem:[%s1 + $0xdc] sm:$0xf]
  %v122 = vld [vmem:[%s1 + $0xe0] sm:$0xf]
  %v123 = vld [vmem:[%s1 + $0xe4] sm:$0xf]
  %v124 = vld [vmem:[%s1 + $0xe8] sm:$0xf]
  %v125 = vld [vmem:[%s1 + $0xec] sm:$0xf]
  %v126 = vld [vmem:[%s1 + $0xf0] sm:$0xf]
  %v127 = vld [vmem:[%s1 + $0xf4] sm:$0xf]
  %v128 = vld [vmem:[%s1 + $0xf8] sm:$0xf]
  %v129 = vld [vmem:[%s1 + $0xfc] sm:$0xf]
  %v130 = vld [vmem:[%s1 + $0x100] sm:$0xf]
  %v131 = vld [vmem:[%s1 + $0x104] sm:$0xf]
  %v132 = vld [vmem:[%s1 + $0x108] sm:$0xf]
  %v133 = vld [vmem:[%s1 + $0x10c] sm:$0xf]
  %v134 = vld [vmem:[%s1 + $0x110] sm:$0xf]
  %v135 = vld [vmem:[%s1 + $0x114] sm:$0xf]
  %v136 = vld [vmem:[%s1 + $0x118] sm:$0xf]
  %v137 = vld [vmem:[%s1 + $0x11c] sm:$0xf]
  %v138 = vld [vmem:[%s1 + $0x120] sm:$0xf]
  %v139 = vld [vmem:[%s1 + $0x124] sm:$0xf]
  %v140 = vld [vmem:[%s1 + $0x128] sm:$0xf]
  %v141 = vld [vmem:[%s1 + $0x12c] sm:$0xf]
  %v142 = vld [vmem:[%s1 + $0x130] sm:$0xf]
  %v143 = vld [vmem:[%s1 + $0x134] sm:$0xf]
  %v144 = vld [vmem:[%s1 + $0x138] sm:$0xf]
  %v145 = vld [vmem:[%s1 + $0x13c] sm:$0xf]
  %v146 = vld [vmem:[%s1 + $0x140] sm:$0xf]
  %v147 = vld [vmem:[%s1 + $0x144] sm:$0xf]
  %v148 = vld [vmem:[%s1 + $0x148] sm:$0xf]
  %v149 = vld [vmem:[%s1 + $0x14c] sm:$0xf]
  %v150 = vld [vmem:[%s1 + $0x150] sm:$0xf]
  %v151 = vld [vmem:[%s1 + $0x154] sm:$0xf]
  %v152 = vld [vmem:[%s1 + $0x158] sm:$0xf]
  %v153 = vld [vmem:[%s1 + $0x15c] sm:$0xf]
  %v154 = vld [vmem:[%s1 + $0x160] sm:$0xf]
  %v155 = vld [vmem:[%s1 + $0x164] sm:$0xf]
  %v156 = vld [vmem:[%s1 + $0x168] sm:$0xf]
  %v157 = vld [vmem:[%s1 + $0x16c] sm:$0xf]
  %v158 = vld [vmem:[%s1 + $0x170] sm:$0xf]
  %v159 = vld [vmem:[%s1 + $0x174] sm:$0xf]
  %v160 = vld [vmem:[%s1 + $0x178] sm:$0xf]
  %v161 = vld [vmem:[%s1 + $0x17c] sm:$0xf]
  %v165 = vunpack.c.l.b16 %v63
  %v166 = vunpack.c.h.b16 %v63
  %v167 = vunpack.c.l.b16 %v64
  %v168 = vunpack.c.h.b16 %v64
  %v169 = vunpack.c.l.b16 %v65
  %v170 = vunpack.c.h.b16 %v65
  %v171 = vpack.c.b16 %v165, %v165
  %v172 = vpack.c.b16 %v166, %v166
  %v173 = vpack.c.b16 %v167, %v167
  %v174 = vpack.c.b16 %v168, %v168
  %v175 = vpack.c.b16 %v169, %v169
  %v176 = vpack.c.b16 %v170, %v170
  %v279 = vunpack.c.l.b16 %v66
  %v280 = vunpack.c.l.b16 %v67
  %v281 = vunpack.c.l.b16 %v68
  %v282 = vunpack.c.l.b16 %v69
  %v283 = vunpack.c.l.b16 %v70
  %v284 = vunpack.c.l.b16 %v71
  %v285 = vunpack.c.l.b16 %v72
  %v286 = vunpack.c.l.b16 %v73
  %v287 = vunpack.c.l.b16 %v74
  %v288 = vunpack.c.l.b16 %v75
  %v289 = vunpack.c.l.b16 %v76
  %v290 = vunpack.c.l.b16 %v77
  %v291 = vunpack.c.l.b16 %v78
  %v292 = vunpack.c.l.b16 %v79
  %v293 = vunpack.c.l.b16 %v80
  %v294 = vunpack.c.l.b16 %v81
  %v295 = vunpack.c.l.b16 %v82
  %v296 = vunpack.c.l.b16 %v83
  %v297 = vunpack.c.l.b16 %v84
  %v298 = vunpack.c.l.b16 %v85
  %v299 = vunpack.c.l.b16 %v86
  %v300 = vunpack.c.l.b16 %v87
  %v301 = vunpack.c.l.b16 %v88
  %v302 = vunpack.c.l.b16 %v89
  %v303 = vunpack.c.l.b16 %v90
  %v304 = vunpack.c.l.b16 %v91
  %v305 = vunpack.c.l.b16 %v92
  %v306 = vunpack.c.l.b16 %v93
  %v307 = vunpack.c.l.b16 %v94
  %v308 = vunpack.c.l.b16 %v95
  %v309 = vunpack.c.l.b16 %v96
  %v310 = vunpack.c.l.b16 %v97
  %v311 = vunpack.c.l.b16 %v98
  %v312 = vunpack.c.l.b16 %v99
  %v313 = vunpack.c.l.b16 %v100
  %v314 = vunpack.c.l.b16 %v101
  %v315 = vunpack.c.l.b16 %v102
  %v316 = vunpack.c.l.b16 %v103
  %v317 = vunpack.c.l.b16 %v104
  %v318 = vunpack.c.l.b16 %v105
  %v319 = vunpack.c.l.b16 %v106
  %v320 = vunpack.c.l.b16 %v107
  %v321 = vunpack.c.l.b16 %v108
  %v322 = vunpack.c.l.b16 %v109
  %v323 = vunpack.c.l.b16 %v110
  %v324 = vunpack.c.l.b16 %v111
  %v325 = vunpack.c.l.b16 %v112
  %v326 = vunpack.c.l.b16 %v113
  %v327 = vunpack.c.l.b16 %v114
  %v328 = vunpack.c.l.b16 %v115
  %v329 = vunpack.c.l.b16 %v116
  %v330 = vunpack.c.l.b16 %v117
  %v331 = vunpack.c.l.b16 %v118
  %v332 = vunpack.c.l.b16 %v119
  %v333 = vunpack.c.l.b16 %v120
  %v334 = vunpack.c.l.b16 %v121
  %v335 = vunpack.c.l.b16 %v122
  %v336 = vunpack.c.l.b16 %v123
  %v337 = vunpack.c.l.b16 %v124
  %v338 = vunpack.c.l.b16 %v125
  %v339 = vunpack.c.l.b16 %v126
  %v340 = vunpack.c.l.b16 %v127
  %v341 = vunpack.c.l.b16 %v128
  %v342 = vunpack.c.l.b16 %v129
  %v343 = vunpack.c.l.b16 %v130
  %v344 = vunpack.c.l.b16 %v131
  %v345 = vunpack.c.l.b16 %v132
  %v346 = vunpack.c.l.b16 %v133
  %v347 = vunpack.c.l.b16 %v134
  %v348 = vunpack.c.l.b16 %v135
  %v349 = vunpack.c.l.b16 %v136
  %v350 = vunpack.c.l.b16 %v137
  %v351 = vunpack.c.l.b16 %v138
  %v352 = vunpack.c.l.b16 %v139
  %v353 = vunpack.c.l.b16 %v140
  %v354 = vunpack.c.l.b16 %v141
  %v355 = vunpack.c.l.b16 %v142
  %v356 = vunpack.c.l.b16 %v143
  %v357 = vunpack.c.l.b16 %v144
  %v358 = vunpack.c.l.b16 %v145
  %v359 = vunpack.c.l.b16 %v146
  %v360 = vunpack.c.l.b16 %v147
  %v361 = vunpack.c.l.b16 %v148
  %v362 = vunpack.c.l.b16 %v149
  %v363 = vunpack.c.l.b16 %v150
  %v364 = vunpack.c.l.b16 %v151
  %v365 = vunpack.c.l.b16 %v152
  %v366 = vunpack.c.l.b16 %v153
  %v367 = vunpack.c.l.b16 %v154
  %v368 = vunpack.c.l.b16 %v155
  %v369 = vunpack.c.l.b16 %v156
  %v370 = vunpack.c.l.b16 %v157
  %v371 = vunpack.c.l.b16 %v158
  %v372 = vunpack.c.l.b16 %v159
  %v373 = vunpack.c.l.b16 %v160
  %v374 = vunpack.c.l.b16 %v161
  %v375 = vpack.c.b16 %v280, %v279
  %v376 = vpack.c.b16 %v282, %v281
  %v377 = vpack.c.b16 %v284, %v283
  %v378 = vpack.c.b16 %v286, %v285
  %v379 = vpack.c.b16 %v288, %v287
  %v380 = vpack.c.b16 %v290, %v289
  %v381 = vpack.c.b16 %v292, %v291
  %v382 = vpack.c.b16 %v294, %v293
  %v383 = vpack.c.b16 %v296, %v295
  %v384 = vpack.c.b16 %v298, %v297
  %v385 = vpack.c.b16 %v300, %v299
  %v386 = vpack.c.b16 %v302, %v301
  %v387 = vpack.c.b16 %v304, %v303
  %v388 = vpack.c.b16 %v306, %v305
  %v389 = vpack.c.b16 %v308, %v307
  %v390 = vpack.c.b16 %v310, %v309
  %v391 = vpack.c.b16 %v312, %v311
  %v392 = vpack.c.b16 %v314, %v313
  %v393 = vpack.c.b16 %v316, %v315
  %v394 = vpack.c.b16 %v318, %v317
  %v395 = vpack.c.b16 %v320, %v319
  %v396 = vpack.c.b16 %v322, %v321
  %v397 = vpack.c.b16 %v324, %v323
  %v398 = vpack.c.b16 %v326, %v325
  %v399 = vpack.c.b16 %v328, %v327
  %v400 = vpack.c.b16 %v330, %v329
  %v401 = vpack.c.b16 %v332, %v331
  %v402 = vpack.c.b16 %v334, %v333
  %v403 = vpack.c.b16 %v336, %v335
  %v404 = vpack.c.b16 %v338, %v337
  %v405 = vpack.c.b16 %v340, %v339
  %v406 = vpack.c.b16 %v342, %v341
  %v407 = vpack.c.b16 %v344, %v343
  %v408 = vpack.c.b16 %v346, %v345
  %v409 = vpack.c.b16 %v348, %v347
  %v410 = vpack.c.b16 %v350, %v349
  %v411 = vpack.c.b16 %v352, %v351
  %v412 = vpack.c.b16 %v354, %v353
  %v413 = vpack.c.b16 %v356, %v355
  %v414 = vpack.c.b16 %v358, %v357
  %v415 = vpack.c.b16 %v360, %v359
  %v416 = vpack.c.b16 %v362, %v361
  %v417 = vpack.c.b16 %v364, %v363
  %v418 = vpack.c.b16 %v366, %v365
  %v419 = vpack.c.b16 %v368, %v367
  %v420 = vpack.c.b16 %v370, %v369
  %v421 = vpack.c.b16 %v372, %v371
  %v422 = vpack.c.b16 %v374, %v373
  %471 = vmatprep.subr.bf16.mxu0 0
  %472 = vmatpush1.bf16.msra.mxu0 %v375
  %473 = vmatprep.subr.bf16.mxu0 0
  %474 = vmatpush1.bf16.msra.mxu0 %v376
  %475 = vmatprep.subr.bf16.mxu0 0
  %476 = vmatpush1.bf16.msra.mxu0 %v377
  %477 = vmatprep.subr.bf16.mxu0 0
  %478 = vmatpush1.bf16.msra.mxu0 %v378
  %479 = vmatprep.subr.bf16.mxu0 0
  %480 = vmatpush1.bf16.msra.mxu0 %v379
  %481 = vmatprep.subr.bf16.mxu0 0
  %482 = vmatpush1.bf16.msra.mxu0 %v380
  %483 = vmatprep.subr.bf16.mxu0 0
  %484 = vmatpush1.bf16.msra.mxu0 %v381
  %485 = vmatprep.subr.bf16.mxu0 0
  %486 = vmatpush1.bf16.msra.mxu0 %v382
  %487 = vmatprep.subr.bf16.mxu0 0
  %488 = vmatpush1.bf16.msra.mxu0 %v383
  %489 = vmatprep.subr.bf16.mxu0 0
  %490 = vmatpush1.bf16.msra.mxu0 %v384
  %491 = vmatprep.subr.bf16.mxu0 0
  %492 = vmatpush1.bf16.msra.mxu0 %v385
  %493 = vmatprep.subr.bf16.mxu0 0
  %494 = vmatpush1.bf16.msra.mxu0 %v386
  %495 = vmatprep.subr.bf16.mxu0 0
  %496 = vmatpush1.bf16.msra.mxu0 %v387
  %497 = vmatprep.subr.bf16.mxu0 0
  %498 = vmatpush1.bf16.msra.mxu0 %v388
  %499 = vmatprep.subr.bf16.mxu0 0
  %500 = vmatpush1.bf16.msra.mxu0 %v389
  %501 = vmatprep.subr.bf16.mxu0 0
  %502 = vmatpush1.bf16.msra.mxu0 %v390
  %503 = vmatprep.mubr.bf16.mxu0 %v172
  %504 = vmatmul.mubr.bf16.gmra.mrb[0].mxu0 %v171
  %v505 = vpop.f32.mrb[0].mxu0
  %v506 = vadd.f32 0.0, %v505
  %v507 = vpop.f32.mrb[0].mxu0
  %v508 = vpop.f32.mrb[0].mxu0
  %v509 = vpop.f32.mrb[0].mxu0
  %510 = vdwg.mxu0
  %511 = vmatprep.subr.bf16.mxu0 0
  %512 = vmatpush1.bf16.msra.mxu0 %v391
  %513 = vmatprep.subr.bf16.mxu0 0
  %514 = vmatpush1.bf16.msra.mxu0 %v392
  %515 = vmatprep.subr.bf16.mxu0 0
  %516 = vmatpush1.bf16.msra.mxu0 %v393
  %517 = vmatprep.subr.bf16.mxu0 0
  %518 = vmatpush1.bf16.msra.mxu0 %v394
  %519 = vmatprep.subr.bf16.mxu0 0
  %520 = vmatpush1.bf16.msra.mxu0 %v395
  %521 = vmatprep.subr.bf16.mxu0 0
  %522 = vmatpush1.bf16.msra.mxu0 %v396
  %523 = vmatprep.subr.bf16.mxu0 0
  %524 = vmatpush1.bf16.msra.mxu0 %v397
  %525 = vmatprep.subr.bf16.mxu0 0
  %526 = vmatpush1.bf16.msra.mxu0 %v398
  %527 = vmatprep.subr.bf16.mxu0 0
  %528 = vmatpush1.bf16.msra.mxu0 %v399
  %529 = vmatprep.subr.bf16.mxu0 0
  %530 = vmatpush1.bf16.msra.mxu0 %v400
  %531 = vmatprep.subr.bf16.mxu0 0
  %532 = vmatpush1.bf16.msra.mxu0 %v401
  %533 = vmatprep.subr.bf16.mxu0 0
  %534 = vmatpush1.bf16.msra.mxu0 %v402
  %535 = vmatprep.subr.bf16.mxu0 0
  %536 = vmatpush1.bf16.msra.mxu0 %v403
  %537 = vmatprep.subr.bf16.mxu0 0
  %538 = vmatpush1.bf16.msra.mxu0 %v404
  %539 = vmatprep.subr.bf16.mxu0 0
  %540 = vmatpush1.bf16.msra.mxu0 %v405
  %541 = vmatprep.subr.bf16.mxu0 0
  %542 = vmatpush1.bf16.msra.mxu0 %v406
  %543 = vmatprep.mubr.bf16.mxu0 %v174
  %544 = vmatmul.mubr.bf16.gmra.mrb[0].mxu0 %v173
  %v545 = vpop.f32.mrb[0].mxu0
  %v546 = vadd.f32 %v506, %v545
  %v547 = vpop.f32.mrb[0].mxu0
  %v548 = vpop.f32.mrb[0].mxu0
  %v549 = vpop.f32.mrb[0].mxu0
  %550 = vdwg.mxu0
  %551 = vmatprep.subr.bf16.mxu0 0
  %552 = vmatpush1.bf16.msra.mxu0 %v407
  %553 = vmatprep.subr.bf16.mxu0 0
  %554 = vmatpush1.bf16.msra.mxu0 %v408
  %555 = vmatprep.subr.bf16.mxu0 0
  %556 = vmatpush1.bf16.msra.mxu0 %v409
  %557 = vmatprep.subr.bf16.mxu0 0
  %558 = vmatpush1.bf16.msra.mxu0 %v410
  %559 = vmatprep.subr.bf16.mxu0 0
  %560 = vmatpush1.bf16.msra.mxu0 %v411
  %561 = vmatprep.subr.bf16.mxu0 0
  %562 = vmatpush1.bf16.msra.mxu0 %v412
  %563 = vmatprep.subr.bf16.mxu0 0
  %564 = vmatpush1.bf16.msra.mxu0 %v413
  %565 = vmatprep.subr.bf16.mxu0 0
  %566 = vmatpush1.bf16.msra.mxu0 %v414
  %567 = vmatprep.subr.bf16.mxu0 0
  %568 = vmatpush1.bf16.msra.mxu0 %v415
  %569 = vmatprep.subr.bf16.mxu0 0
  %570 = vmatpush1.bf16.msra.mxu0 %v416
  %571 = vmatprep.subr.bf16.mxu0 0
  %572 = vmatpush1.bf16.msra.mxu0 %v417
  %573 = vmatprep.subr.bf16.mxu0 0
  %574 = vmatpush1.bf16.msra.mxu0 %v418
  %575 = vmatprep.subr.bf16.mxu0 0
  %576 = vmatpush1.bf16.msra.mxu0 %v419
  %577 = vmatprep.subr.bf16.mxu0 0
  %578 = vmatpush1.bf16.msra.mxu0 %v420
  %579 = vmatprep.subr.bf16.mxu0 0
  %580 = vmatpush1.bf16.msra.mxu0 %v421
  %581 = vmatprep.subr.bf16.mxu0 0
  %582 = vmatpush1.bf16.msra.mxu0 %v422
  %583 = vmatprep.mubr.bf16.mxu0 %v176
  %584 = vmatmul.mubr.bf16.gmra.mrb[0].mxu0 %v175
  %v585 = vpop.f32.mrb[0].mxu0
  %v586 = vadd.f32 %v546, %v585
  %v587 = vpop.f32.mrb[0].mxu0
  %v588 = vpop.f32.mrb[0].mxu0
  %v589 = vpop.f32.mrb[0].mxu0
  %590 = vdwg.mxu0
  %v591 = vadd.f32 %v62, %v586
  %592 = vst [vmem:[#allocation2] sm:$0xff] %v591
  // Predicated region
  $region74: #{_mlp_forward_impl.1} parent=0 // pred_check
    %p593 = pneg %p57
  $region75: #{_mlp_forward_impl.1} parent=0 // pred_check_branch
    %595 = sbr.rel (%p593) target = $region77
  $region76: #{_mlp_forward_impl.1} parent=0 // pred_region
    %v596 = vld [vmem:[#allocation2] sm:$0xff]
    %v597 = vld [vmem:[%s2] sm:$0x1]
    %v599 = vlaneseq
    %v600 = vshrl.u32 %v599, 7
    %v601 = vsub.s32 0, %v600
    %v602 = vrot.slane %v597, %v601
    %v604 = vadd.f32 %v596, %v602
    %v605 = vpack.c.bf16 %v604, %v604
    %v606 = vld [vmem:[%s3] sm:$0xf]
    %v607 = vld [vmem:[%s3 + $0x4] sm:$0xf]
    %v608 = vld [vmem:[%s3 + $0x8] sm:$0xf]
    %v609 = vld [vmem:[%s3 + $0xc] sm:$0xf]
    %v610 = vld [vmem:[%s3 + $0x10] sm:$0xf]
    %v611 = vld [vmem:[%s3 + $0x14] sm:$0xf]
    %v612 = vld [vmem:[%s3 + $0x18] sm:$0xf]
    %v613 = vld [vmem:[%s3 + $0x1c] sm:$0xf]
    %v614 = vld [vmem:[%s3 + $0x20] sm:$0xf]
    %v615 = vld [vmem:[%s3 + $0x24] sm:$0xf]
    %v616 = vld [vmem:[%s3 + $0x28] sm:$0xf]
    %v617 = vld [vmem:[%s3 + $0x2c] sm:$0xf]
    %v618 = vld [vmem:[%s3 + $0x30] sm:$0xf]
    %v619 = vld [vmem:[%s3 + $0x34] sm:$0xf]
    %v620 = vld [vmem:[%s3 + $0x38] sm:$0xf]
    %v621 = vld [vmem:[%s3 + $0x3c] sm:$0xf]
    %v622 = vld [vmem:[%s4] sm:$0x1]
    %v624 = vlaneseq
    %v625 = vshrl.u32 %v624, 7
    %v626 = vsub.s32 0, %v625
    %v627 = vrot.slane %v622, %v626
    %v645 = vunpack.c.l.b16 %v606
    %v646 = vunpack.c.l.b16 %v607
    %v647 = vunpack.c.l.b16 %v608
    %v648 = vunpack.c.l.b16 %v609
    %v649 = vunpack.c.l.b16 %v610
    %v650 = vunpack.c.l.b16 %v611
    %v651 = vunpack.c.l.b16 %v612
    %v652 = vunpack.c.l.b16 %v613
    %v653 = vunpack.c.l.b16 %v614
    %v654 = vunpack.c.l.b16 %v615
    %v655 = vunpack.c.l.b16 %v616
    %v656 = vunpack.c.l.b16 %v617
    %v657 = vunpack.c.l.b16 %v618
    %v658 = vunpack.c.l.b16 %v619
    %v659 = vunpack.c.l.b16 %v620
    %v660 = vunpack.c.l.b16 %v621
    %v661 = vpack.c.b16 %v646, %v645
    %v662 = vpack.c.b16 %v648, %v647
    %v663 = vpack.c.b16 %v650, %v649
    %v664 = vpack.c.b16 %v652, %v651
    %v665 = vpack.c.b16 %v654, %v653
    %v666 = vpack.c.b16 %v656, %v655
    %v667 = vpack.c.b16 %v658, %v657
    %v668 = vpack.c.b16 %v660, %v659
    %677 = vmatprep.subr.bf16.mxu0 0
    %678 = vmatpush1.bf16.msra.mxu0 %v661
    %679 = vmatprep.subr.bf16.mxu0 0
    %680 = vmatpush1.bf16.msra.mxu0 %v662
    %681 = vmatprep.subr.bf16.mxu0 0
    %682 = vmatpush1.bf16.msra.mxu0 %v663
    %683 = vmatprep.subr.bf16.mxu0 0
    %684 = vmatpush1.bf16.msra.mxu0 %v664
    %685 = vmatprep.subr.bf16.mxu0 0
    %686 = vmatpush1.bf16.msra.mxu0 %v665
    %687 = vmatprep.subr.bf16.mxu0 0
    %688 = vmatpush1.bf16.msra.mxu0 %v666
    %689 = vmatprep.subr.bf16.mxu0 0
    %690 = vmatpush1.bf16.msra.mxu0 %v667
    %691 = vmatprep.subr.bf16.mxu0 0
    %692 = vmatpush1.bf16.msra.mxu0 %v668
    %693 = vmatprep.subr.bf16.mxu0 0
    %694 = vmatpush1.bf16.msra.mxu0 0
    %695 = vmatprep.subr.bf16.mxu0 0
    %696 = vmatpush1.bf16.msra.mxu0 0
    %697 = vmatprep.subr.bf16.mxu0 0
    %698 = vmatpush1.bf16.msra.mxu0 0
    %699 = vmatprep.subr.bf16.mxu0 0
    %700 = vmatpush1.bf16.msra.mxu0 0
    %701 = vmatprep.subr.bf16.mxu0 0
    %702 = vmatpush1.bf16.msra.mxu0 0
    %703 = vmatprep.subr.bf16.mxu0 0
    %704 = vmatpush1.bf16.msra.mxu0 0
    %705 = vmatprep.subr.bf16.mxu0 0
    %706 = vmatpush1.bf16.msra.mxu0 0
    %707 = vmatprep.subr.bf16.mxu0 0
    %708 = vmatpush1.bf16.msra.mxu0 0
    %709 = vmatprep.mubr.bf16.mxu0 0
    %710 = vmatmul.mubr.bf16.gmra.mrb[0].mxu0 %v605
    %v711 = vpop.f32.mrb[0].mxu0
    %v712 = vadd.f32 %v627, %v711
    %v713 = vpop.f32.mrb[0].mxu0
    %v714 = vpop.f32.mrb[0].mxu0
    %v715 = vpop.f32.mrb[0].mxu0
    %716 = vdwg.mxu0
    %717 = vadd.xlane.f32.xlu0 %v712
    %v718 = vpop.xlane.xlu0 %717
    %v719 = vmul.f32 %v712, %v712
    %720 = vadd.xlane.f32.xlu0 %v719
    %v721 = vpop.xlane.xlu0 %720
    %v722 = vmul.f32 %v718, 0.0078125
    %v723 = vmul.f32 %v721, 0.0078125
    %v724 = vmul.f32 %v722, %v722
    %v725 = vsub.f32 %v723, %v724
    %v726 = vsub.f32 %v712, %v722
    %v727 = vadd.f32 %v725, 1e-05
    %v728 = vrsqrt.pop %v727
    %v729 = vmul.f32 %v726, %v728
    %v730 = vld [vmem:[%s5] sm:$0x1]
    %v732 = vlaneseq
    %v733 = vshrl.u32 %v732, 7
    %v734 = vsub.s32 0, %v733
    %v735 = vrot.slane %v730, %v734
    %v737 = vmul.f32 %v729, %v735
    %v738 = vld [vmem:[%s6] sm:$0x1]
    %v740 = vlaneseq
    %v741 = vshrl.u32 %v740, 7
    %v742 = vsub.s32 0, %v741
    %v743 = vrot.slane %v738, %v742
    %v745 = vadd.f32 %v737, %v743
    %v746 = vmax.f32 %v745, 0.0
    %v747 = vadd.f32 %v604, %v746
    %v748 = vpack.c.bf16 %v747, %v747
    %v749 = vld [vmem:[%s7] sm:$0xf]
    %v750 = vld [vmem:[%s7 + $0x4] sm:$0xf]
    %v751 = vld [vmem:[%s7 + $0x8] sm:$0xf]
    %v752 = vld [vmem:[%s7 + $0xc] sm:$0xf]
    %v753 = vld [vmem:[%s7 + $0x10] sm:$0xf]
    %v754 = vld [vmem:[%s7 + $0x14] sm:$0xf]
    %v755 = vld [vmem:[%s7 + $0x18] sm:$0xf]
    %v756 = vld [vmem:[%s7 + $0x1c] sm:$0xf]
    %v757 = vld [vmem:[%s7 + $0x20] sm:$0xf]
    %v758 = vld [vmem:[%s7 + $0x24] sm:$0xf]
    %v759 = vld [vmem:[%s7 + $0x28] sm:$0xf]
    %v760 = vld [vmem:[%s7 + $0x2c] sm:$0xf]
    %v761 = vld [vmem:[%s7 + $0x30] sm:$0xf]
    %v762 = vld [vmem:[%s7 + $0x34] sm:$0xf]
    %v763 = vld [vmem:[%s7 + $0x38] sm:$0xf]
    %v764 = vld [vmem:[%s7 + $0x3c] sm:$0xf]
    %v765 = vld [vmem:[%s8] sm:$0x1]
    %v767 = vlaneseq
    %v768 = vshrl.u32 %v767, 7
    %v769 = vsub.s32 0, %v768
    %v770 = vrot.slane %v765, %v769
    %v788 = vunpack.c.l.b16 %v749
    %v789 = vunpack.c.l.b16 %v750
    %v790 = vunpack.c.l.b16 %v751
    %v791 = vunpack.c.l.b16 %v752
    %v792 = vunpack.c.l.b16 %v753
    %v793 = vunpack.c.l.b16 %v754
    %v794 = vunpack.c.l.b16 %v755
    %v795 = vunpack.c.l.b16 %v756
    %v796 = vunpack.c.l.b16 %v757
    %v797 = vunpack.c.l.b16 %v758
    %v798 = vunpack.c.l.b16 %v759
    %v799 = vunpack.c.l.b16 %v760
    %v800 = vunpack.c.l.b16 %v761
    %v801 = vunpack.c.l.b16 %v762
    %v802 = vunpack.c.l.b16 %v763
    %v803 = vunpack.c.l.b16 %v764
    %v804 = vpack.c.b16 %v789, %v788
    %v805 = vpack.c.b16 %v791, %v790
    %v806 = vpack.c.b16 %v793, %v792
    %v807 = vpack.c.b16 %v795, %v794
    %v808 = vpack.c.b16 %v797, %v796
    %v809 = vpack.c.b16 %v799, %v798
    %v810 = vpack.c.b16 %v801, %v800
    %v811 = vpack.c.b16 %v803, %v802
    %820 = vmatprep.subr.bf16.mxu0 0
    %821 = vmatpush1.bf16.msra.mxu0 %v804
    %822 = vmatprep.subr.bf16.mxu0 0
    %823 = vmatpush1.bf16.msra.mxu0 %v805
    %824 = vmatprep.subr.bf16.mxu0 0
    %825 = vmatpush1.bf16.msra.mxu0 %v806
    %826 = vmatprep.subr.bf16.mxu0 0
    %827 = vmatpush1.bf16.msra.mxu0 %v807
    %828 = vmatprep.subr.bf16.mxu0 0
    %829 = vmatpush1.bf16.msra.mxu0 %v808
    %830 = vmatprep.subr.bf16.mxu0 0
    %831 = vmatpush1.bf16.msra.mxu0 %v809
    %832 = vmatprep.subr.bf16.mxu0 0
    %833 = vmatpush1.bf16.msra.mxu0 %v810
    %834 = vmatprep.subr.bf16.mxu0 0
    %835 = vmatpush1.bf16.msra.mxu0 %v811
    %836 = vmatprep.subr.bf16.mxu0 0
    %837 = vmatpush1.bf16.msra.mxu0 0
    %838 = vmatprep.subr.bf16.mxu0 0
    %839 = vmatpush1.bf16.msra.mxu0 0
    %840 = vmatprep.subr.bf16.mxu0 0
    %841 = vmatpush1.bf16.msra.mxu0 0
    %842 = vmatprep.subr.bf16.mxu0 0
    %843 = vmatpush1.bf16.msra.mxu0 0
    %844 = vmatprep.subr.bf16.mxu0 0
    %845 = vmatpush1.bf16.msra.mxu0 0
    %846 = vmatprep.subr.bf16.mxu0 0
    %847 = vmatpush1.bf16.msra.mxu0 0
    %848 = vmatprep.subr.bf16.mxu0 0
    %849 = vmatpush1.bf16.msra.mxu0 0
    %850 = vmatprep.subr.bf16.mxu0 0
    %851 = vmatpush1.bf16.msra.mxu0 0
    %852 = vmatprep.mubr.bf16.mxu0 0
    %853 = vmatmul.mubr.bf16.gmra.mrb[0].mxu0 %v748
    %v854 = vpop.f32.mrb[0].mxu0
    %v855 = vadd.f32 %v770, %v854
    %v856 = vpop.f32.mrb[0].mxu0
    %v857 = vpop.f32.mrb[0].mxu0
    %v858 = vpop.f32.mrb[0].mxu0
    %859 = vdwg.mxu0
    %860 = vadd.xlane.f32.xlu0 %v855
    %v861 = vpop.xlane.xlu0 %860
    %v862 = vmul.f32 %v855, %v855
    %863 = vadd.xlane.f32.xlu0 %v862
    %v864 = vpop.xlane.xlu0 %863
    %v865 = vmul.f32 %v861, 0.0078125
    %v866 = vmul.f32 %v864, 0.0078125
    %v867 = vmul.f32 %v865, %v865
    %v868 = vsub.f32 %v866, %v867
    %v869 = vsub.f32 %v855, %v865
    %v870 = vadd.f32 %v868, 1e-05
    %v871 = vrsqrt.pop %v870
    %v872 = vmul.f32 %v869, %v871
    %v873 = vld [vmem:[%s9] sm:$0x1]
    %v875 = vlaneseq
    %v876 = vshrl.u32 %v875, 7
    %v877 = vsub.s32 0, %v876
    %v878 = vrot.slane %v873, %v877
    %v880 = vmul.f32 %v872, %v878
    %v881 = vld [vmem:[%s10] sm:$0x1]
    %v883 = vlaneseq
    %v884 = vshrl.u32 %v883, 7
    %v885 = vsub.s32 0, %v884
    %v886 = vrot.slane %v881, %v885
    %v888 = vadd.f32 %v880, %v886
    %v889 = vmax.f32 %v888, 0.0
    %v890 = vadd.f32 %v747, %v889
    %v891 = vpack.c.bf16 %v890, %v890
    %v892 = vld [vmem:[%s11] sm:$0xf]
    %v893 = vld [vmem:[%s11 + $0x4] sm:$0xf]
    %v894 = vld [vmem:[%s11 + $0x8] sm:$0xf]
    %v895 = vld [vmem:[%s11 + $0xc] sm:$0xf]
    %v896 = vld [vmem:[%s11 + $0x10] sm:$0xf]
    %v897 = vld [vmem:[%s11 + $0x14] sm:$0xf]
    %v898 = vld [vmem:[%s11 + $0x18] sm:$0xf]
    %v899 = vld [vmem:[%s11 + $0x1c] sm:$0xf]
    %v900 = vld [vmem:[%s11 + $0x20] sm:$0xf]
    %v901 = vld [vmem:[%s11 + $0x24] sm:$0xf]
    %v902 = vld [vmem:[%s11 + $0x28] sm:$0xf]
    %v903 = vld [vmem:[%s11 + $0x2c] sm:$0xf]
    %v904 = vld [vmem:[%s11 + $0x30] sm:$0xf]
    %v905 = vld [vmem:[%s11 + $0x34] sm:$0xf]
    %v906 = vld [vmem:[%s11 + $0x38] sm:$0xf]
    %v907 = vld [vmem:[%s11 + $0x3c] sm:$0xf]
    %v908 = vld [vmem:[%s12] sm:$0x1]
    %v910 = vlaneseq
    %v911 = vshrl.u32 %v910, 7
    %v912 = vsub.s32 0, %v911
    %v913 = vrot.slane %v908, %v912
    %v931 = vunpack.c.l.b16 %v892
    %v932 = vunpack.c.l.b16 %v893
    %v933 = vunpack.c.l.b16 %v894
    %v934 = vunpack.c.l.b16 %v895
    %v935 = vunpack.c.l.b16 %v896
    %v936 = vunpack.c.l.b16 %v897
    %v937 = vunpack.c.l.b16 %v898
    %v938 = vunpack.c.l.b16 %v899
    %v939 = vunpack.c.l.b16 %v900
    %v940 = vunpack.c.l.b16 %v901
    %v941 = vunpack.c.l.b16 %v902
    %v942 = vunpack.c.l.b16 %v903
    %v943 = vunpack.c.l.b16 %v904
    %v944 = vunpack.c.l.b16 %v905
    %v945 = vunpack.c.l.b16 %v906
    %v946 = vunpack.c.l.b16 %v907
    %v947 = vpack.c.b16 %v932, %v931
    %v948 = vpack.c.b16 %v934, %v933
    %v949 = vpack.c.b16 %v936, %v935
    %v950 = vpack.c.b16 %v938, %v937
    %v951 = vpack.c.b16 %v940, %v939
    %v952 = vpack.c.b16 %v942, %v941
    %v953 = vpack.c.b16 %v944, %v943
    %v954 = vpack.c.b16 %v946, %v945
    %963 = vmatprep.subr.bf16.mxu0 0
    %964 = vmatpush1.bf16.msra.mxu0 %v947
    %965 = vmatprep.subr.bf16.mxu0 0
    %966 = vmatpush1.bf16.msra.mxu0 %v948
    %967 = vmatprep.subr.bf16.mxu0 0
    %968 = vmatpush1.bf16.msra.mxu0 %v949
    %969 = vmatprep.subr.bf16.mxu0 0
    %970 = vmatpush1.bf16.msra.mxu0 %v950
    %971 = vmatprep.subr.bf16.mxu0 0
    %972 = vmatpush1.bf16.msra.mxu0 %v951
    %973 = vmatprep.subr.bf16.mxu0 0
    %974 = vmatpush1.bf16.msra.mxu0 %v952
    %975 = vmatprep.subr.bf16.mxu0 0
    %976 = vmatpush1.bf16.msra.mxu0 %v953
    %977 = vmatprep.subr.bf16.mxu0 0
    %978 = vmatpush1.bf16.msra.mxu0 %v954
    %979 = vmatprep.subr.bf16.mxu0 0
    %980 = vmatpush1.bf16.msra.mxu0 0
    %981 = vmatprep.subr.bf16.mxu0 0
    %982 = vmatpush1.bf16.msra.mxu0 0
    %983 = vmatprep.subr.bf16.mxu0 0
    %984 = vmatpush1.bf16.msra.mxu0 0
    %985 = vmatprep.subr.bf16.mxu0 0
    %986 = vmatpush1.bf16.msra.mxu0 0
    %987 = vmatprep.subr.bf16.mxu0 0
    %988 = vmatpush1.bf16.msra.mxu0 0
    %989 = vmatprep.subr.bf16.mxu0 0
    %990 = vmatpush1.bf16.msra.mxu0 0
    %991 = vmatprep.subr.bf16.mxu0 0
    %992 = vmatpush1.bf16.msra.mxu0 0
    %993 = vmatprep.subr.bf16.mxu0 0
    %994 = vmatpush1.bf16.msra.mxu0 0
    %995 = vmatprep.mubr.bf16.mxu0 0
    %996 = vmatmul.mubr.bf16.gmra.mrb[0].mxu0 %v891
    %v997 = vpop.f32.mrb[0].mxu0
    %v998 = vadd.f32 %v913, %v997
    %v999 = vpop.f32.mrb[0].mxu0
    %v1000 = vpop.f32.mrb[0].mxu0
    %v1001 = vpop.f32.mrb[0].mxu0
    %1002 = vdwg.mxu0
    %1003 = vadd.xlane.f32.xlu0 %v998
    %v1004 = vpop.xlane.xlu0 %1003
    %v1005 = vmul.f32 %v998, %v998
    %1006 = vadd.xlane.f32.xlu0 %v1005
    %v1007 = vpop.xlane.xlu0 %1006
    %v1008 = vmul.f32 %v1004, 0.0078125
    %v1009 = vmul.f32 %v1007, 0.0078125
    %v1010 = vmul.f32 %v1008, %v1008
    %v1011 = vsub.f32 %v1009, %v1010
    %v1012 = vsub.f32 %v998, %v1008
    %v1013 = vadd.f32 %v1011, 1e-05
    %v1014 = vrsqrt.pop %v1013
    %v1015 = vmul.f32 %v1012, %v1014
    %v1016 = vld [vmem:[%s13] sm:$0x1]
    %v1018 = vlaneseq
    %v1019 = vshrl.u32 %v1018, 7
    %v1020 = vsub.s32 0, %v1019
    %v1021 = vrot.slane %v1016, %v1020
    %v1023 = vmul.f32 %v1015, %v1021
    %v1024 = vld [vmem:[%s14] sm:$0x1]
    %v1026 = vlaneseq
    %v1027 = vshrl.u32 %v1026, 7
    %v1028 = vsub.s32 0, %v1027
    %v1029 = vrot.slane %v1024, %v1028
    %v1031 = vadd.f32 %v1023, %v1029
    %v1032 = vmax.f32 %v1031, 0.0
    %v1033 = vadd.f32 %v890, %v1032
    %v1034 = vpack.c.bf16 %v1033, %v1033
    %v1035 = vld [vmem:[%s15] sm:$0xf]
    %v1036 = vld [vmem:[%s15 + $0x4] sm:$0xf]
    %v1037 = vld [vmem:[%s15 + $0x8] sm:$0xf]
    %v1038 = vld [vmem:[%s15 + $0xc] sm:$0xf]
    %v1039 = vld [vmem:[%s15 + $0x10] sm:$0xf]
    %v1040 = vld [vmem:[%s15 + $0x14] sm:$0xf]
    %v1041 = vld [vmem:[%s15 + $0x18] sm:$0xf]
    %v1042 = vld [vmem:[%s15 + $0x1c] sm:$0xf]
    %v1043 = vld [vmem:[%s15 + $0x20] sm:$0xf]
    %v1044 = vld [vmem:[%s15 + $0x24] sm:$0xf]
    %v1045 = vld [vmem:[%s15 + $0x28] sm:$0xf]
    %v1046 = vld [vmem:[%s15 + $0x2c] sm:$0xf]
    %v1047 = vld [vmem:[%s15 + $0x30] sm:$0xf]
    %v1048 = vld [vmem:[%s15 + $0x34] sm:$0xf]
    %v1049 = vld [vmem:[%s15 + $0x38] sm:$0xf]
    %v1050 = vld [vmem:[%s15 + $0x3c] sm:$0xf]
    %v1051 = vld [vmem:[%s16] sm:$0x1]
    %v1053 = vlaneseq
    %v1054 = vshrl.u32 %v1053, 7
    %v1055 = vsub.s32 0, %v1054
    %v1056 = vrot.slane %v1051, %v1055
    %v1074 = vunpack.c.l.b16 %v1035
    %v1075 = vunpack.c.l.b16 %v1036
    %v1076 = vunpack.c.l.b16 %v1037
    %v1077 = vunpack.c.l.b16 %v1038
    %v1078 = vunpack.c.l.b16 %v1039
    %v1079 = vunpack.c.l.b16 %v1040
    %v1080 = vunpack.c.l.b16 %v1041
    %v1081 = vunpack.c.l.b16 %v1042
    %v1082 = vunpack.c.l.b16 %v1043
    %v1083 = vunpack.c.l.b16 %v1044
    %v1084 = vunpack.c.l.b16 %v1045
    %v1085 = vunpack.c.l.b16 %v1046
    %v1086 = vunpack.c.l.b16 %v1047
    %v1087 = vunpack.c.l.b16 %v1048
    %v1088 = vunpack.c.l.b16 %v1049
    %v1089 = vunpack.c.l.b16 %v1050
    %v1090 = vpack.c.b16 %v1075, %v1074
    %v1091 = vpack.c.b16 %v1077, %v1076
    %v1092 = vpack.c.b16 %v1079, %v1078
    %v1093 = vpack.c.b16 %v1081, %v1080
    %v1094 = vpack.c.b16 %v1083, %v1082
    %v1095 = vpack.c.b16 %v1085, %v1084
    %v1096 = vpack.c.b16 %v1087, %v1086
    %v1097 = vpack.c.b16 %v1089, %v1088
    %1106 = vmatprep.subr.bf16.mxu0 0
    %1107 = vmatpush1.bf16.msra.mxu0 %v1090
    %1108 = vmatprep.subr.bf16.mxu0 0
    %1109 = vmatpush1.bf16.msra.mxu0 %v1091
    %1110 = vmatprep.subr.bf16.mxu0 0
    %1111 = vmatpush1.bf16.msra.mxu0 %v1092
    %1112 = vmatprep.subr.bf16.mxu0 0
    %1113 = vmatpush1.bf16.msra.mxu0 %v1093
    %1114 = vmatprep.subr.bf16.mxu0 0
    %1115 = vmatpush1.bf16.msra.mxu0 %v1094
    %1116 = vmatprep.subr.bf16.mxu0 0
    %1117 = vmatpush1.bf16.msra.mxu0 %v1095
    %1118 = vmatprep.subr.bf16.mxu0 0
    %1119 = vmatpush1.bf16.msra.mxu0 %v1096
    %1120 = vmatprep.subr.bf16.mxu0 0
    %1121 = vmatpush1.bf16.msra.mxu0 %v1097
    %1122 = vmatprep.subr.bf16.mxu0 0
    %1123 = vmatpush1.bf16.msra.mxu0 0
    %1124 = vmatprep.subr.bf16.mxu0 0
    %1125 = vmatpush1.bf16.msra.mxu0 0
    %1126 = vmatprep.subr.bf16.mxu0 0
    %1127 = vmatpush1.bf16.msra.mxu0 0
    %1128 = vmatprep.subr.bf16.mxu0 0
    %1129 = vmatpush1.bf16.msra.mxu0 0
    %1130 = vmatprep.subr.bf16.mxu0 0
    %1131 = vmatpush1.bf16.msra.mxu0 0
    %1132 = vmatprep.subr.bf16.mxu0 0
    %1133 = vmatpush1.bf16.msra.mxu0 0
    %1134 = vmatprep.subr.bf16.mxu0 0
    %1135 = vmatpush1.bf16.msra.mxu0 0
    %1136 = vmatprep.subr.bf16.mxu0 0
    %1137 = vmatpush1.bf16.msra.mxu0 0
    %1138 = vmatprep.mubr.bf16.mxu0 0
    %1139 = vmatmul.mubr.bf16.gmra.mrb[0].mxu0 %v1034
    %v1140 = vpop.f32.mrb[0].mxu0
    %v1141 = vadd.f32 %v1056, %v1140
    %v1142 = vpop.f32.mrb[0].mxu0
    %v1143 = vpop.f32.mrb[0].mxu0
    %v1144 = vpop.f32.mrb[0].mxu0
    %1145 = vdwg.mxu0
    %1146 = vst [vmem:[%s17] sm:$0xff] %v1141
  $region77: #{_mlp_forward_impl.1} parent=0 // pred_fallthru
    _
  // Predicated region
  $region78: #{_mlp_forward_impl.1} parent=0 // pred_check
    _
  $region79: #{_mlp_forward_impl.1} parent=0 // pred_check_branch
    %1148 = sbr.rel (0) target = $region81
  $region80: #{_mlp_forward_impl.1} parent=0 // pred_region
    _
  $region81: #{_mlp_forward_impl.1} parent=0 // pred_fallthru
    _
  // Predicated region
  $region82: #{_mlp_forward_impl.1} parent=0 // pred_check
    _
  $region83: #{_mlp_forward_impl.1} parent=0 // pred_check_branch
    %1150 = sbr.rel (0) target = $region85
  $region84: #{_mlp_forward_impl.1} parent=0 // pred_region
    _
  $region85: #{_mlp_forward_impl.1} parent=0 // pred_fallthru
    _

</llo_original>
